<compile_context>
chip_gen: v7x
topology: tpu7x:2x2x1
jax: 0.10.0
libtpu: 0.0.40
codegen_flags: <defaults>
</compile_context>

<pallas_src>
import functools

import jax
import jax.numpy as jnp
from jax.experimental import pallas as pl
from jax.experimental.pallas import tpu as pltpu


# ----------------------------- small helpers -------------------------------

def _round_up(x, m):
    return ((x + m - 1) // m) * m


def _apply_act(v, act, alpha):
    if act == "leaky_relu":
        return jnp.where(v >= 0, v, alpha * v)
    if act == "relu":
        return jnp.maximum(v, 0.0)
    if act == "tanh":
        return jnp.tanh(v)
    return v


# ----------------------------- Pallas kernels ------------------------------

def _mm_kernel(x_ref, w_ref, b_ref, o_ref, *, act, alpha):
    # bf16 x bf16 -> f32 accumulation on the MXU; bias/activation in f32.
    acc = jnp.dot(x_ref[...], w_ref[...], preferred_element_type=jnp.float32)
    acc = acc + b_ref[...]
    acc = _apply_act(acc, act, alpha)
    o_ref[...] = acc.astype(o_ref.dtype)


def _mm_stats_kernel(x_ref, w_ref, b_ref, o_ref, sum_ref, sq_ref, *, act, alpha):
    # Same matmul, plus fused per-tile BatchNorm statistics (sum, sum-of-sq)
    # over the pre-activation output.  Stats are per-tile (no cross-tile
    # accumulation in-kernel) so the M grid axis stays "parallel".
    acc = jnp.dot(x_ref[...], w_ref[...], preferred_element_type=jnp.float32)
    acc = acc + b_ref[...]
    s = jnp.sum(acc, axis=0, keepdims=True)
    sq = jnp.sum(acc * acc, axis=0, keepdims=True)
    sum_ref[...] = jnp.broadcast_to(s, sum_ref.shape)
    sq_ref[...] = jnp.broadcast_to(sq, sq_ref.shape)
    acc = _apply_act(acc, act, alpha)
    o_ref[...] = acc.astype(o_ref.dtype)


def _scale_shift_act_kernel(x_ref, s_ref, t_ref, o_ref, *, act, alpha):
    y = x_ref[...].astype(jnp.float32) * s_ref[...] + t_ref[...]
    y = _apply_act(y, act, alpha)
    o_ref[...] = y.astype(o_ref.dtype)


# --------------------------- Pallas call wrappers ---------------------------

_MAX_TILE_M = 512   # fits comfortably in v7x's 64 MiB VMEM with double-buffering


def matmul_bias_act(cols, w_mat, b_row, *, act="none", alpha=0.2,
                    with_stats=False, out_dtype=jnp.bfloat16, tile_m=_MAX_TILE_M):
    """(M,K) @ (K,N) + bias, fused activation, optional fused BN statistics."""
    M, K = cols.shape
    _, N = w_mat.shape

    if cols.dtype != jnp.bfloat16:
        cols = cols.astype(jnp.bfloat16)

    tile_m = int(min(tile_m, _round_up(M, 16)))      # bf16 sublane packing
    M_pad = _round_up(M, tile_m)
    if M_pad != M:
        cols = jnp.pad(cols, ((0, M_pad - M), (0, 0)))
    grid_m = M_pad // tile_m

    in_specs = [
        pl.BlockSpec((tile_m, K), lambda i: (i, 0)),
        pl.BlockSpec((K, N), lambda i: (0, 0)),
        pl.BlockSpec((1, N), lambda i: (0, 0)),
    ]
    cparams = pltpu.CompilerParams(dimension_semantics=("parallel",))

    if not with_stats:
        kern = functools.partial(_mm_kernel, act=act, alpha=alpha)
        y = pl.pallas_call(
            kern,
            out_shape=jax.ShapeDtypeStruct((M_pad, N), out_dtype),
            grid=(grid_m,),
            in_specs=in_specs,
            out_specs=pl.BlockSpec((tile_m, N), lambda i: (i, 0)),
            compiler_params=cparams,
        )(cols, w_mat, b_row)
        return y[:M]

    kern = functools.partial(_mm_stats_kernel, act=act, alpha=alpha)
    y, s_raw, sq_raw = pl.pallas_call(
        kern,
        out_shape=(jax.ShapeDtypeStruct((M_pad, N), out_dtype),
                   jax.ShapeDtypeStruct((grid_m * 8, N), jnp.float32),
                   jax.ShapeDtypeStruct((grid_m * 8, N), jnp.float32)),
        grid=(grid_m,),
        in_specs=in_specs,
        out_specs=(pl.BlockSpec((tile_m, N), lambda i: (i, 0)),
                   pl.BlockSpec((8, N), lambda i: (i, 0)),
                   pl.BlockSpec((8, N), lambda i: (i, 0))),
        compiler_params=cparams,
    )(cols, w_mat, b_row)

    s = s_raw.reshape(grid_m, 8, N)[:, 0, :].sum(axis=0)
    sq = sq_raw.reshape(grid_m, 8, N)[:, 0, :].sum(axis=0)
    pad_rows = M_pad - M
    if pad_rows:
        # padded zero rows contribute exactly `bias` per element; remove them.
        b = b_row.reshape(-1).astype(jnp.float32)
        s = s - pad_rows * b
        sq = sq - pad_rows * b * b
    return y[:M], s, sq


def scale_shift_act(x, scale, shift, *, act, alpha=0.2,
                    out_dtype=jnp.bfloat16, tile_m=_MAX_TILE_M):
    """Per-channel y = x*scale + shift with fused activation (BN normalize)."""
    M, C = x.shape
    tile_m = int(min(tile_m, _round_up(M, 16)))
    M_pad = _round_up(M, tile_m)
    if M_pad != M:
        x = jnp.pad(x, ((0, M_pad - M), (0, 0)))
    grid_m = M_pad // tile_m
    kern = functools.partial(_scale_shift_act_kernel, act=act, alpha=alpha)
    y = pl.pallas_call(
        kern,
        out_shape=jax.ShapeDtypeStruct((M_pad, C), out_dtype),
        grid=(grid_m,),
        in_specs=[pl.BlockSpec((tile_m, C), lambda i: (i, 0)),
                  pl.BlockSpec((1, C), lambda i: (0, 0)),
                  pl.BlockSpec((1, C), lambda i: (0, 0))],
        out_specs=pl.BlockSpec((tile_m, C), lambda i: (i, 0)),
        compiler_params=pltpu.CompilerParams(dimension_semantics=("parallel",)),
    )(x, scale, shift)
    return y[:M]


# ------------------------------- JAX glue ----------------------------------

def _im2col(x_pad, kh, kw, stride, Ho, Wo, r0=0, c0=0):
    """Patch matrix (N*Ho*Wo, kh*kw*C) from an already-padded NHWC tensor."""
    patches = []
    for i in range(kh):
        for j in range(kw):
            patches.append(x_pad[:, r0 + i: r0 + i + stride * Ho: stride,
                                 c0 + j: c0 + j + stride * Wo: stride, :])
    cols = jnp.stack(patches, axis=3)                 # (N, Ho, Wo, kh*kw, C)
    N, _, _, C = x_pad.shape
    return cols.reshape(N * Ho * Wo, kh * kw * C)


def conv2d_packed(x_nhwc, w_mat, b_row, *, k, stride, pad, co,
                  act="none", alpha=0.2, with_stats=False,
                  out_dtype=jnp.bfloat16):
    N, H, W, _ = x_nhwc.shape
    xp = jnp.pad(x_nhwc, ((0, 0), (pad, pad), (pad, pad), (0, 0)))
    Ho = (H + 2 * pad - k) // stride + 1
    Wo = (W + 2 * pad - k) // stride + 1
    cols = _im2col(xp, k, k, stride, Ho, Wo)
    res = matmul_bias_act(cols, w_mat, b_row, act=act, alpha=alpha,
                          with_stats=with_stats, out_dtype=out_dtype)
    if with_stats:
        y, s, sq = res
        return y[:, :co].reshape(N, Ho, Wo, co), s[:co], sq[:co]
    return res[:, :co].reshape(N, Ho, Wo, co)


def conv_transpose2d_packed(x_nhwc, w_phase, b_row, *, co, act="none",
                            alpha=0.2, with_stats=False,
                            out_dtype=jnp.bfloat16):
    """ConvTranspose2d(k=4, stride=2, pad=1) via stride-phase decomposition:
    one 2x2-sub-kernel matmul per (row-parity, col-parity) output phase."""
    N, H, W, _ = x_nhwc.shape
    xp = jnp.pad(x_nhwc, ((0, 0), (1, 1), (1, 1), (0, 0)))
    s_tot, sq_tot = None, None
    ys = []
    for p in range(2):
        row = []
        for q in range(2):
            cols = _im2col(xp, 2, 2, 1, H, W, r0=p, c0=q)
            res = matmul_bias_act(cols, w_phase[p][q], b_row, act=act,
                                  alpha=alpha, with_stats=with_stats,
                                  out_dtype=out_dtype)
            if with_stats:
                y, s, sq = res
                s_tot = s if s_tot is None else s_tot + s
                sq_tot = sq if sq_tot is None else sq_tot + sq
            else:
                y = res
            row.append(y[:, :co].reshape(N, H, W, co))
        ys.append(row)
    # interleave phases: out[:, 2m+p, 2n+q, :] = ys[p][q][:, m, n, :]
    even = jnp.stack([ys[0][0], ys[0][1]], axis=3)    # (N, H, W, 2, co)
    odd = jnp.stack([ys[1][0], ys[1][1]], axis=3)
    out = jnp.stack([even, odd], axis=2).reshape(N, 2 * H, 2 * W, co)
    if with_stats:
        return out, s_tot[:co], sq_tot[:co]
    return out


def _bn_scale_shift(s, sq, count, gamma, beta, eps=1e-5):
    mean = s / count
    var = jnp.maximum(sq / count - mean * mean, 0.0)
    # TODO(synk): E[x^2]-E[x]^2 in f32 is fine at these magnitudes; switch to a
    # two-pass / Welford accumulation if activation magnitudes grow large.
    scale = gamma / jnp.sqrt(var + eps)
    shift = beta - mean * scale
    return scale.reshape(1, -1), shift.reshape(1, -1)


# ------------------------ parameter packing (one-time) ----------------------

# kernel-tap indices for the (even, odd) output-parity phases of a
# ConvTranspose2d with k=4, stride=2, pad=1.
_PHASE_TAPS = ((3, 1), (2, 0))


def _pack_conv_weight(w_oihw, pad_co_to=None):
    """PyTorch Conv2d weight (Co,Ci,kh,kw) -> (kh*kw*Ci, Co) bf16 matrix."""
    Co, Ci, kh, kw = w_oihw.shape
    m = jnp.transpose(w_oihw, (2, 3, 1, 0)).reshape(kh * kw * Ci, Co)
    if pad_co_to is not None and pad_co_to > Co:
        m = jnp.pad(m, ((0, 0), (0, pad_co_to - Co)))
    return m.astype(jnp.bfloat16)


def _pack_deconv_weight(w_iokk, pad_co_to=None):
    """PyTorch ConvTranspose2d weight (Ci,Co,4,4) -> 2x2 tuple of
    (2*2*Ci, Co) bf16 phase matrices."""
    Ci, Co, kh, kw = w_iokk.shape
    assert kh == 4 and kw == 4
    phases = []
    for p in range(2):
        row = []
        for q in range(2):
            sub = jnp.take(w_iokk, jnp.array(_PHASE_TAPS[p]), axis=2)
            sub = jnp.take(sub, jnp.array(_PHASE_TAPS[q]), axis=3)  # (Ci,Co,2,2)
            m = jnp.transpose(sub, (2, 3, 0, 1)).reshape(4 * Ci, Co)
            if pad_co_to is not None and pad_co_to > Co:
                m = jnp.pad(m, ((0, 0), (0, pad_co_to - Co)))
            row.append(m.astype(jnp.bfloat16))
        phases.append(tuple(row))
    return tuple(phases)


def pack_params(params):
    def bias_row(b, pad_to=None):
        if pad_to is not None and pad_to > b.shape[0]:
            b = jnp.pad(b, (0, pad_to - b.shape[0]))
        return b.reshape(1, -1).astype(jnp.float32)

    return {
        "w1": _pack_conv_weight(params["w1"]), "b1": bias_row(params["b1"]),
        "w2": _pack_conv_weight(params["w2"]), "b2": bias_row(params["b2"]),
        "bn1_g": params["bn1_g"].astype(jnp.float32),
        "bn1_b": params["bn1_b"].astype(jnp.float32),
        "w3": _pack_deconv_weight(params["w3"]), "b3": bias_row(params["b3"]),
        "bn2_g": params["bn2_g"].astype(jnp.float32),
        "bn2_b": params["bn2_b"].astype(jnp.float32),
        # pad final Co 3 -> 128 for lane-dense output stores
        "w4": _pack_deconv_weight(params["w4"], pad_co_to=128),
        "b4": bias_row(params["b4"], pad_to=128),
    }


# ------------------------------ forward pass --------------------------------

def generator_forward(packed, x_nchw):
    x = jnp.transpose(x_nchw, (0, 2, 3, 1)).astype(jnp.float32)      # -> NHWC

    # ----- encoder -----
    h1 = conv2d_packed(x, packed["w1"], packed["b1"], k=4, stride=2, pad=1,
                       co=64, act="leaky_relu", alpha=0.2)
    h2, s2, sq2 = conv2d_packed(h1, packed["w2"], packed["b2"], k=4, stride=2,
                                pad=1, co=128, act="none", with_stats=True)
    N, H2, W2, C2 = h2.shape
    scale, shift = _bn_scale_shift(s2, sq2, N * H2 * W2,
                                   packed["bn1_g"], packed["bn1_b"])
    h2 = scale_shift_act(h2.reshape(-1, C2), scale, shift,
                         act="leaky_relu", alpha=0.2).reshape(N, H2, W2, C2)

    # ----- decoder -----
    h3, s3, sq3 = conv_transpose2d_packed(h2, packed["w3"], packed["b3"],
                                          co=64, act="none", with_stats=True)
    _, H3, W3, C3 = h3.shape
    scale, shift = _bn_scale_shift(s3, sq3, N * H3 * W3,
                                   packed["bn2_g"], packed["bn2_b"])
    h3 = scale_shift_act(h3.reshape(-1, C3), scale, shift,
                         act="relu").reshape(N, H3, W3, C3)

    out = conv_transpose2d_packed(h3, packed["w4"], packed["b4"], co=3,
                                  act="tanh", out_dtype=jnp.float32)
    return jnp.transpose(out, (0, 3, 1, 2))                           # -> NCHW


# ------------------------ pure-JAX reference (f32) ---------------------------

def _reference_forward(params, x_nchw, eps=1e-5):
    x = jnp.transpose(x_nchw, (0, 2, 3, 1)).astype(jnp.float32)

    def conv(v, w_oihw, b, stride, pad):
        w = jnp.transpose(w_oihw, (2, 3, 1, 0))                       # HWIO
        y = jax.lax.conv_general_dilated(
            v, w, (stride, stride), [(pad, pad), (pad, pad)],
            dimension_numbers=("NHWC", "HWIO", "NHWC"))
        return y + b

    def deconv(v, w_iokk, b, stride, pad):
        k = w_iokk.shape[2]
        w = jnp.transpose(w_iokk[:, :, ::-1, ::-1], (2, 3, 0, 1))     # HWIO
        y = jax.lax.conv_general_dilated(
            v, w, (1, 1), [(k - 1 - pad,) * 2] * 2,
            lhs_dilation=(stride, stride),
            dimension_numbers=("NHWC", "HWIO", "NHWC"))
        return y + b

    def bn(v, g, b):
        mean = v.mean(axis=(0, 1, 2))
        var = v.var(axis=(0, 1, 2))
        return (v - mean) / jnp.sqrt(var + eps) * g + b

    lrelu = lambda v: jnp.where(v >= 0, v, 0.2 * v)
    h = lrelu(conv(x, params["w1"], params["b1"], 2, 1))
    h = lrelu(bn(conv(h, params["w2"], params["b2"], 2, 1),
                 params["bn1_g"], params["bn1_b"]))
    h = jax.nn.relu(bn(deconv(h, params["w3"], params["b3"], 2, 1),
                       params["bn2_g"], params["bn2_b"]))
    h = jnp.tanh(deconv(h, params["w4"], params["b4"], 2, 1))
    return jnp.transpose(h, (0, 3, 1, 2))


# ------------------------------- params init --------------------------------

def init_params(key):
    ks = jax.random.split(key, 4)
    std = 0.05
    return {
        "w1": std * jax.random.normal(ks[0], (64, 1, 4, 4), jnp.float32),
        "b1": jnp.zeros((64,), jnp.float32),
        "w2": std * jax.random.normal(ks[1], (128, 64, 4, 4), jnp.float32),
        "b2": jnp.zeros((128,), jnp.float32),
        "bn1_g": jnp.ones((128,), jnp.float32),
        "bn1_b": jnp.zeros((128,), jnp.float32),
        "w3": std * jax.random.normal(ks[2], (128, 64, 4, 4), jnp.float32),
        "b3": jnp.zeros((64,), jnp.float32),
        "bn2_g": jnp.ones((64,), jnp.float32),
        "bn2_b": jnp.zeros((64,), jnp.float32),
        "w4": std * jax.random.normal(ks[3], (64, 3, 4, 4), jnp.float32),
        "b4": jnp.zeros((3,), jnp.float32),
    }


if __name__ == "__main__":
    key = jax.random.PRNGKey(0)
    pkey, xkey = jax.random.split(key)
    params = init_params(pkey)
    packed = pack_params(params)                      # one-time weight packing
    x = jax.random.normal(xkey, (2, 1, 16, 16), jnp.float32)   # NCHW, 1 channel

    fwd = jax.jit(generator_forward)
    out = jax.block_until_ready(fwd(packed, x))

    assert out.shape == (2, 3, 16, 16), out.shape
    assert out.dtype == jnp.float32
    assert bool(jnp.all(jnp.isfinite(out)))
    assert bool(jnp.all(jnp.abs(out) <= 1.0 + 1e-6))          # tanh range

    # numerical check against a pure-JAX f32 reference (bf16 MXU operands ->
    # loose tolerance).
    ref = _reference_forward(params, x)
    assert bool(jnp.allclose(out, ref, rtol=0.0, atol=1e-1)), \
        float(jnp.max(jnp.abs(out - ref)))

    print("KERNEL_OK")
</pallas_src>

<mosaic_0001>
module attributes {stable_mosaic.version = 11 : i64} {
  func.func @_mm_kernel(%arg0: i32, %arg1: memref<128x16xbf16, #tpu.memory_space<vmem>>, %arg2: memref<16x64xbf16, #tpu.memory_space<vmem>>, %arg3: memref<1x64xf32, #tpu.memory_space<vmem>>, %arg4: memref<128x64xbf16, #tpu.memory_space<vmem>>) attributes {dimension_semantics = [#tpu.dimension_semantics<parallel>], iteration_bounds = array<i64: 1>, scalar_prefetch = 0 : i64, scratch_operands = 0 : i64, tpu.core_type = #tpu.core_type<tc>, window_params = [{transform_indices = @transform_0, window_bounds = array<i64: 128, 16>}, {pipeline_mode = #tpu.pipeline_mode<synchronous>, transform_indices = @transform_1, window_bounds = array<i64: 16, 64>}, {pipeline_mode = #tpu.pipeline_mode<synchronous>, transform_indices = @transform_2, window_bounds = array<i64: 1, 64>}, {transform_indices = @transform_3, window_bounds = array<i64: 128, 64>}]} {
    %c0 = arith.constant 0 : index
    %c0_0 = arith.constant 0 : index
    %0 = vector.load %arg1[%c0, %c0_0] : memref<128x16xbf16, #tpu.memory_space<vmem>>, vector<128x16xbf16>
    %c0_1 = arith.constant 0 : index
    %c0_2 = arith.constant 0 : index
    %1 = vector.load %arg2[%c0_1, %c0_2] : memref<16x64xbf16, #tpu.memory_space<vmem>>, vector<16x64xbf16>
    %cst = arith.constant dense<0.000000e+00> : vector<128x64xf32>
    %2 = tpu.matmul %0, %1, %cst {dimension_numbers = #tpu.dot_dimension_numbers<[1], [0], [0], [1], [0, 0, 1, 1], [], []>} : vector<128x16xbf16>, vector<16x64xbf16>, vector<128x64xf32> -> vector<128x64xf32>
    %c0_3 = arith.constant 0 : index
    %c0_4 = arith.constant 0 : index
    %3 = vector.load %arg3[%c0_3, %c0_4] : memref<1x64xf32, #tpu.memory_space<vmem>>, vector<1x64xf32>
    %4 = vector.broadcast %3 : vector<1x64xf32> to vector<128x64xf32>
    %5 = arith.addf %2, %4 : vector<128x64xf32>
    %cst_5 = arith.constant 0.000000e+00 : f32
    %6 = vector.broadcast %cst_5 : f32 to vector<128x64xf32>
    %7 = arith.cmpf oge, %5, %6 : vector<128x64xf32>
    %cst_6 = arith.constant 2.000000e-01 : f32
    %8 = vector.broadcast %cst_6 : f32 to vector<128x64xf32>
    %9 = arith.mulf %8, %5 : vector<128x64xf32>
    %10 = arith.select %7, %5, %9 : vector<128x64xi1>, vector<128x64xf32>
    %11 = arith.truncf %10 : vector<128x64xf32> to vector<128x64xbf16>
    %c0_7 = arith.constant 0 : index
    %c0_8 = arith.constant 0 : index
    %12 = vector.load %arg4[%c0_7, %c0_8] : memref<128x64xbf16, #tpu.memory_space<vmem>>, vector<128x64xbf16>
    tpu.vector_store %arg4[%c0_7, %c0_8], %11 {strides = array<i32>} : memref<128x64xbf16, #tpu.memory_space<vmem>>, vector<128x64xbf16>,
    return
  }
  func.func @transform_0(%arg0: i32) -> (i32, i32) {
    %c0_i32 = arith.constant 0 : i32
    %c0_i32_0 = arith.constant 0 : i32
    return %arg0, %c0_i32 : i32, i32
  }
  func.func @transform_1(%arg0: i32) -> (i32, i32) {
    %c0_i32 = arith.constant 0 : i32
    %c0_i32_0 = arith.constant 0 : i32
    %c0_i32_1 = arith.constant 0 : i32
    return %c0_i32, %c0_i32_0 : i32, i32
  }
  func.func @transform_2(%arg0: i32) -> (i32, i32) {
    %c0_i32 = arith.constant 0 : i32
    %c0_i32_0 = arith.constant 0 : i32
    %c0_i32_1 = arith.constant 0 : i32
    return %c0_i32, %c0_i32_0 : i32, i32
  }
  func.func @transform_3(%arg0: i32) -> (i32, i32) {
    %c0_i32 = arith.constant 0 : i32
    %c0_i32_0 = arith.constant 0 : i32
    return %arg0, %c0_i32 : i32, i32
  }
}

module attributes {stable_mosaic.version = 11 : i64} {
  func.func @_scale_shift_act_kernel(%arg0: i32, %arg1: memref<32x128xbf16, #tpu.memory_space<vmem>>, %arg2: memref<1x128xf32, #tpu.memory_space<vmem>>, %arg3: memref<1x128xf32, #tpu.memory_space<vmem>>, %arg4: memref<32x128xbf16, #tpu.memory_space<vmem>>) attributes {dimension_semantics = [#tpu.dimension_semantics<parallel>], iteration_bounds = array<i64: 1>, scalar_prefetch = 0 : i64, scratch_operands = 0 : i64, tpu.core_type = #tpu.core_type<tc>, window_params = [{transform_indices = @transform_0, window_bounds = array<i64: 32, 128>}, {pipeline_mode = #tpu.pipeline_mode<synchronous>, transform_indices = @transform_1, window_bounds = array<i64: 1, 128>}, {pipeline_mode = #tpu.pipeline_mode<synchronous>, transform_indices = @transform_2, window_bounds = array<i64: 1, 128>}, {transform_indices = @transform_3, window_bounds = array<i64: 32, 128>}]} {
    %c0 = arith.constant 0 : index
    %c0_0 = arith.constant 0 : index
    %0 = vector.load %arg1[%c0, %c0_0] : memref<32x128xbf16, #tpu.memory_space<vmem>>, vector<32x128xbf16>
    %1 = arith.extf %0 : vector<32x128xbf16> to vector<32x128xf32>
    %c0_1 = arith.constant 0 : index
    %c0_2 = arith.constant 0 : index
    %2 = vector.load %arg2[%c0_1, %c0_2] : memref<1x128xf32, #tpu.memory_space<vmem>>, vector<1x128xf32>
    %3 = vector.broadcast %2 : vector<1x128xf32> to vector<32x128xf32>
    %4 = arith.mulf %1, %3 : vector<32x128xf32>
    %c0_3 = arith.constant 0 : index
    %c0_4 = arith.constant 0 : index
    %5 = vector.load %arg3[%c0_3, %c0_4] : memref<1x128xf32, #tpu.memory_space<vmem>>, vector<1x128xf32>
    %6 = vector.broadcast %5 : vector<1x128xf32> to vector<32x128xf32>
    %7 = arith.addf %4, %6 : vector<32x128xf32>
    %cst = arith.constant 0.000000e+00 : f32
    %8 = vector.broadcast %cst : f32 to vector<32x128xf32>
    %9 = arith.cmpf oge, %7, %8 : vector<32x128xf32>
    %cst_5 = arith.constant 2.000000e-01 : f32
    %10 = vector.broadcast %cst_5 : f32 to vector<32x128xf32>
    %11 = arith.mulf %10, %7 : vector<32x128xf32>
    %12 = arith.select %9, %7, %11 : vector<32x128xi1>, vector<32x128xf32>
    %13 = arith.truncf %12 : vector<32x128xf32> to vector<32x128xbf16>
    %c0_6 = arith.constant 0 : index
    %c0_7 = arith.constant 0 : index
    %14 = vector.load %arg4[%c0_6, %c0_7] : memref<32x128xbf16, #tpu.memory_space<vmem>>, vector<32x128xbf16>
    tpu.vector_store %arg4[%c0_6, %c0_7], %13 {strides = array<i32>} : memref<32x128xbf16, #tpu.memory_space<vmem>>, vector<32x128xbf16>,
    return
  }
  func.func @transform_0(%arg0: i32) -> (i32, i32) {
    %c0_i32 = arith.constant 0 : i32
    %c0_i32_0 = arith.constant 0 : i32
    return %arg0, %c0_i32 : i32, i32
  }
  func.func @transform_1(%arg0: i32) -> (i32, i32) {
    %c0_i32 = arith.constant 0 : i32
    %c0_i32_0 = arith.constant 0 : i32
    %c0_i32_1 = arith.constant 0 : i32
    return %c0_i32, %c0_i32_0 : i32, i32
  }
  func.func @transform_2(%arg0: i32) -> (i32, i32) {
    %c0_i32 = arith.constant 0 : i32
    %c0_i32_0 = arith.constant 0 : i32
    %c0_i32_1 = arith.constant 0 : i32
    return %c0_i32, %c0_i32_0 : i32, i32
  }
  func.func @transform_3(%arg0: i32) -> (i32, i32) {
    %c0_i32 = arith.constant 0 : i32
    %c0_i32_0 = arith.constant 0 : i32
    return %arg0, %c0_i32 : i32, i32
  }
}

module attributes {stable_mosaic.version = 11 : i64} {
  func.func @_mm_stats_kernel(%arg0: i32, %arg1: memref<32x1024xbf16, #tpu.memory_space<vmem>>, %arg2: memref<1024x128xbf16, #tpu.memory_space<vmem>>, %arg3: memref<1x128xf32, #tpu.memory_space<vmem>>, %arg4: memref<32x128xbf16, #tpu.memory_space<vmem>>, %arg5: memref<8x128xf32, #tpu.memory_space<vmem>>, %arg6: memref<8x128xf32, #tpu.memory_space<vmem>>) attributes {dimension_semantics = [#tpu.dimension_semantics<parallel>], iteration_bounds = array<i64: 1>, scalar_prefetch = 0 : i64, scratch_operands = 0 : i64, tpu.core_type = #tpu.core_type<tc>, window_params = [{transform_indices = @transform_0, window_bounds = array<i64: 32, 1024>}, {pipeline_mode = #tpu.pipeline_mode<synchronous>, transform_indices = @transform_1, window_bounds = array<i64: 1024, 128>}, {pipeline_mode = #tpu.pipeline_mode<synchronous>, transform_indices = @transform_2, window_bounds = array<i64: 1, 128>}, {transform_indices = @transform_3, window_bounds = array<i64: 32, 128>}, {transform_indices = @transform_4, window_bounds = array<i64: 8, 128>}, {transform_indices = @transform_5, window_bounds = array<i64: 8, 128>}]} {
    %c0 = arith.constant 0 : index
    %c0_0 = arith.constant 0 : index
    %0 = vector.load %arg1[%c0, %c0_0] : memref<32x1024xbf16, #tpu.memory_space<vmem>>, vector<32x1024xbf16>
    %c0_1 = arith.constant 0 : index
    %c0_2 = arith.constant 0 : index
    %1 = vector.load %arg2[%c0_1, %c0_2] : memref<1024x128xbf16, #tpu.memory_space<vmem>>, vector<1024x128xbf16>
    %cst = arith.constant dense<0.000000e+00> : vector<32x128xf32>
    %2 = tpu.matmul %0, %1, %cst {dimension_numbers = #tpu.dot_dimension_numbers<[1], [0], [0], [1], [0, 0, 1, 1], [], []>} : vector<32x1024xbf16>, vector<1024x128xbf16>, vector<32x128xf32> -> vector<32x128xf32>
    %c0_3 = arith.constant 0 : index
    %c0_4 = arith.constant 0 : index
    %3 = vector.load %arg3[%c0_3, %c0_4] : memref<1x128xf32, #tpu.memory_space<vmem>>, vector<1x128xf32>
    %4 = vector.broadcast %3 : vector<1x128xf32> to vector<32x128xf32>
    %5 = arith.addf %2, %4 : vector<32x128xf32>
    %cst_5 = arith.constant dense<0.000000e+00> : vector<128xf32>
    %6 = vector.multi_reduction <add>, %5, %cst_5 [0] : vector<32x128xf32> to vector<128xf32>
    %7 = vector.shape_cast %6 : vector<128xf32> to vector<1x128xf32>
    %8 = arith.mulf %5, %5 : vector<32x128xf32>
    %cst_6 = arith.constant dense<0.000000e+00> : vector<128xf32>
    %9 = vector.multi_reduction <add>, %8, %cst_6 [0] : vector<32x128xf32> to vector<128xf32>
    %10 = vector.shape_cast %9 : vector<128xf32> to vector<1x128xf32>
    %11 = vector.shape_cast %7 : vector<1x128xf32> to vector<1x128xf32>
    %12 = vector.broadcast %11 : vector<1x128xf32> to vector<8x128xf32>
    %c0_7 = arith.constant 0 : index
    %c0_8 = arith.constant 0 : index
    %13 = vector.load %arg5[%c0_7, %c0_8] : memref<8x128xf32, #tpu.memory_space<vmem>>, vector<8x128xf32>
    tpu.vector_store %arg5[%c0_7, %c0_8], %12 {strides = array<i32>} : memref<8x128xf32, #tpu.memory_space<vmem>>, vector<8x128xf32>,
    %14 = vector.shape_cast %10 : vector<1x128xf32> to vector<1x128xf32>
    %15 = vector.broadcast %14 : vector<1x128xf32> to vector<8x128xf32>
    %c0_9 = arith.constant 0 : index
    %c0_10 = arith.constant 0 : index
    %16 = vector.load %arg6[%c0_9, %c0_10] : memref<8x128xf32, #tpu.memory_space<vmem>>, vector<8x128xf32>
    tpu.vector_store %arg6[%c0_9, %c0_10], %15 {strides = array<i32>} : memref<8x128xf32, #tpu.memory_space<vmem>>, vector<8x128xf32>,
    %17 = arith.truncf %5 : vector<32x128xf32> to vector<32x128xbf16>
    %c0_11 = arith.constant 0 : index
    %c0_12 = arith.constant 0 : index
    %18 = vector.load %arg4[%c0_11, %c0_12] : memref<32x128xbf16, #tpu.memory_space<vmem>>, vector<32x128xbf16>
    tpu.vector_store %arg4[%c0_11, %c0_12], %17 {strides = array<i32>} : memref<32x128xbf16, #tpu.memory_space<vmem>>, vector<32x128xbf16>,
    return
  }
  func.func @transform_0(%arg0: i32) -> (i32, i32) {
    %c0_i32 = arith.constant 0 : i32
    %c0_i32_0 = arith.constant 0 : i32
    return %arg0, %c0_i32 : i32, i32
  }
  func.func @transform_1(%arg0: i32) -> (i32, i32) {
    %c0_i32 = arith.constant 0 : i32
    %c0_i32_0 = arith.constant 0 : i32
    %c0_i32_1 = arith.constant 0 : i32
    return %c0_i32, %c0_i32_0 : i32, i32
  }
  func.func @transform_2(%arg0: i32) -> (i32, i32) {
    %c0_i32 = arith.constant 0 : i32
    %c0_i32_0 = arith.constant 0 : i32
    %c0_i32_1 = arith.constant 0 : i32
    return %c0_i32, %c0_i32_0 : i32, i32
  }
  func.func @transform_3(%arg0: i32) -> (i32, i32) {
    %c0_i32 = arith.constant 0 : i32
    %c0_i32_0 = arith.constant 0 : i32
    return %arg0, %c0_i32 : i32, i32
  }
  func.func @transform_4(%arg0: i32) -> (i32, i32) {
    %c0_i32 = arith.constant 0 : i32
    %c0_i32_0 = arith.constant 0 : i32
    return %arg0, %c0_i32 : i32, i32
  }
  func.func @transform_5(%arg0: i32) -> (i32, i32) {
    %c0_i32 = arith.constant 0 : i32
    %c0_i32_0 = arith.constant 0 : i32
    return %arg0, %c0_i32 : i32, i32
  }
}

module attributes {stable_mosaic.version = 11 : i64} {
  func.func @_mm_stats_kernel(%arg0: i32, %arg1: memref<32x512xbf16, #tpu.memory_space<vmem>>, %arg2: memref<512x64xbf16, #tpu.memory_space<vmem>>, %arg3: memref<1x64xf32, #tpu.memory_space<vmem>>, %arg4: memref<32x64xbf16, #tpu.memory_space<vmem>>, %arg5: memref<8x64xf32, #tpu.memory_space<vmem>>, %arg6: memref<8x64xf32, #tpu.memory_space<vmem>>) attributes {dimension_semantics = [#tpu.dimension_semantics<parallel>], iteration_bounds = array<i64: 1>, scalar_prefetch = 0 : i64, scratch_operands = 0 : i64, tpu.core_type = #tpu.core_type<tc>, window_params = [{transform_indices = @transform_0, window_bounds = array<i64: 32, 512>}, {pipeline_mode = #tpu.pipeline_mode<synchronous>, transform_indices = @transform_1, window_bounds = array<i64: 512, 64>}, {pipeline_mode = #tpu.pipeline_mode<synchronous>, transform_indices = @transform_2, window_bounds = array<i64: 1, 64>}, {transform_indices = @transform_3, window_bounds = array<i64: 32, 64>}, {transform_indices = @transform_4, window_bounds = array<i64: 8, 64>}, {transform_indices = @transform_5, window_bounds = array<i64: 8, 64>}]} {
    %c0 = arith.constant 0 : index
    %c0_0 = arith.constant 0 : index
    %0 = vector.load %arg1[%c0, %c0_0] : memref<32x512xbf16, #tpu.memory_space<vmem>>, vector<32x512xbf16>
    %c0_1 = arith.constant 0 : index
    %c0_2 = arith.constant 0 : index
    %1 = vector.load %arg2[%c0_1, %c0_2] : memref<512x64xbf16, #tpu.memory_space<vmem>>, vector<512x64xbf16>
    %cst = arith.constant dense<0.000000e+00> : vector<32x64xf32>
    %2 = tpu.matmul %0, %1, %cst {dimension_numbers = #tpu.dot_dimension_numbers<[1], [0], [0], [1], [0, 0, 1, 1], [], []>} : vector<32x512xbf16>, vector<512x64xbf16>, vector<32x64xf32> -> vector<32x64xf32>
    %c0_3 = arith.constant 0 : index
    %c0_4 = arith.constant 0 : index
    %3 = vector.load %arg3[%c0_3, %c0_4] : memref<1x64xf32, #tpu.memory_space<vmem>>, vector<1x64xf32>
    %4 = vector.broadcast %3 : vector<1x64xf32> to vector<32x64xf32>
    %5 = arith.addf %2, %4 : vector<32x64xf32>
    %cst_5 = arith.constant dense<0.000000e+00> : vector<64xf32>
    %6 = vector.multi_reduction <add>, %5, %cst_5 [0] : vector<32x64xf32> to vector<64xf32>
    %7 = vector.shape_cast %6 : vector<64xf32> to vector<1x64xf32>
    %8 = arith.mulf %5, %5 : vector<32x64xf32>
    %cst_6 = arith.constant dense<0.000000e+00> : vector<64xf32>
    %9 = vector.multi_reduction <add>, %8, %cst_6 [0] : vector<32x64xf32> to vector<64xf32>
    %10 = vector.shape_cast %9 : vector<64xf32> to vector<1x64xf32>
    %11 = vector.shape_cast %7 : vector<1x64xf32> to vector<1x64xf32>
    %12 = vector.broadcast %11 : vector<1x64xf32> to vector<8x64xf32>
    %c0_7 = arith.constant 0 : index
    %c0_8 = arith.constant 0 : index
    %13 = vector.load %arg5[%c0_7, %c0_8] : memref<8x64xf32, #tpu.memory_space<vmem>>, vector<8x64xf32>
    tpu.vector_store %arg5[%c0_7, %c0_8], %12 {strides = array<i32>} : memref<8x64xf32, #tpu.memory_space<vmem>>, vector<8x64xf32>,
    %14 = vector.shape_cast %10 : vector<1x64xf32> to vector<1x64xf32>
    %15 = vector.broadcast %14 : vector<1x64xf32> to vector<8x64xf32>
    %c0_9 = arith.constant 0 : index
    %c0_10 = arith.constant 0 : index
    %16 = vector.load %arg6[%c0_9, %c0_10] : memref<8x64xf32, #tpu.memory_space<vmem>>, vector<8x64xf32>
    tpu.vector_store %arg6[%c0_9, %c0_10], %15 {strides = array<i32>} : memref<8x64xf32, #tpu.memory_space<vmem>>, vector<8x64xf32>,
    %17 = arith.truncf %5 : vector<32x64xf32> to vector<32x64xbf16>
    %c0_11 = arith.constant 0 : index
    %c0_12 = arith.constant 0 : index
    %18 = vector.load %arg4[%c0_11, %c0_12] : memref<32x64xbf16, #tpu.memory_space<vmem>>, vector<32x64xbf16>
    tpu.vector_store %arg4[%c0_11, %c0_12], %17 {strides = array<i32>} : memref<32x64xbf16, #tpu.memory_space<vmem>>, vector<32x64xbf16>,
    return
  }
  func.func @transform_0(%arg0: i32) -> (i32, i32) {
    %c0_i32 = arith.constant 0 : i32
    %c0_i32_0 = arith.constant 0 : i32
    return %arg0, %c0_i32 : i32, i32
  }
  func.func @transform_1(%arg0: i32) -> (i32, i32) {
    %c0_i32 = arith.constant 0 : i32
    %c0_i32_0 = arith.constant 0 : i32
    %c0_i32_1 = arith.constant 0 : i32
    return %c0_i32, %c0_i32_0 : i32, i32
  }
  func.func @transform_2(%arg0: i32) -> (i32, i32) {
    %c0_i32 = arith.constant 0 : i32
    %c0_i32_0 = arith.constant 0 : i32
    %c0_i32_1 = arith.constant 0 : i32
    return %c0_i32, %c0_i32_0 : i32, i32
  }
  func.func @transform_3(%arg0: i32) -> (i32, i32) {
    %c0_i32 = arith.constant 0 : i32
    %c0_i32_0 = arith.constant 0 : i32
    return %arg0, %c0_i32 : i32, i32
  }
  func.func @transform_4(%arg0: i32) -> (i32, i32) {
    %c0_i32 = arith.constant 0 : i32
    %c0_i32_0 = arith.constant 0 : i32
    return %arg0, %c0_i32 : i32, i32
  }
  func.func @transform_5(%arg0: i32) -> (i32, i32) {
    %c0_i32 = arith.constant 0 : i32
    %c0_i32_0 = arith.constant 0 : i32
    return %arg0, %c0_i32 : i32, i32
  }
}

module attributes {stable_mosaic.version = 11 : i64} {
  func.func @_scale_shift_act_kernel(%arg0: i32, %arg1: memref<128x64xbf16, #tpu.memory_space<vmem>>, %arg2: memref<1x64xf32, #tpu.memory_space<vmem>>, %arg3: memref<1x64xf32, #tpu.memory_space<vmem>>, %arg4: memref<128x64xbf16, #tpu.memory_space<vmem>>) attributes {dimension_semantics = [#tpu.dimension_semantics<parallel>], iteration_bounds = array<i64: 1>, scalar_prefetch = 0 : i64, scratch_operands = 0 : i64, tpu.core_type = #tpu.core_type<tc>, window_params = [{transform_indices = @transform_0, window_bounds = array<i64: 128, 64>}, {pipeline_mode = #tpu.pipeline_mode<synchronous>, transform_indices = @transform_1, window_bounds = array<i64: 1, 64>}, {pipeline_mode = #tpu.pipeline_mode<synchronous>, transform_indices = @transform_2, window_bounds = array<i64: 1, 64>}, {transform_indices = @transform_3, window_bounds = array<i64: 128, 64>}]} {
    %c0 = arith.constant 0 : index
    %c0_0 = arith.constant 0 : index
    %0 = vector.load %arg1[%c0, %c0_0] : memref<128x64xbf16, #tpu.memory_space<vmem>>, vector<128x64xbf16>
    %1 = arith.extf %0 : vector<128x64xbf16> to vector<128x64xf32>
    %c0_1 = arith.constant 0 : index
    %c0_2 = arith.constant 0 : index
    %2 = vector.load %arg2[%c0_1, %c0_2] : memref<1x64xf32, #tpu.memory_space<vmem>>, vector<1x64xf32>
    %3 = vector.broadcast %2 : vector<1x64xf32> to vector<128x64xf32>
    %4 = arith.mulf %1, %3 : vector<128x64xf32>
    %c0_3 = arith.constant 0 : index
    %c0_4 = arith.constant 0 : index
    %5 = vector.load %arg3[%c0_3, %c0_4] : memref<1x64xf32, #tpu.memory_space<vmem>>, vector<1x64xf32>
    %6 = vector.broadcast %5 : vector<1x64xf32> to vector<128x64xf32>
    %7 = arith.addf %4, %6 : vector<128x64xf32>
    %cst = arith.constant 0.000000e+00 : f32
    %8 = vector.broadcast %cst : f32 to vector<128x64xf32>
    %9 = arith.maximumf %7, %8 : vector<128x64xf32>
    %10 = arith.truncf %9 : vector<128x64xf32> to vector<128x64xbf16>
    %c0_5 = arith.constant 0 : index
    %c0_6 = arith.constant 0 : index
    %11 = vector.load %arg4[%c0_5, %c0_6] : memref<128x64xbf16, #tpu.memory_space<vmem>>, vector<128x64xbf16>
    tpu.vector_store %arg4[%c0_5, %c0_6], %10 {strides = array<i32>} : memref<128x64xbf16, #tpu.memory_space<vmem>>, vector<128x64xbf16>,
    return
  }
  func.func @transform_0(%arg0: i32) -> (i32, i32) {
    %c0_i32 = arith.constant 0 : i32
    %c0_i32_0 = arith.constant 0 : i32
    return %arg0, %c0_i32 : i32, i32
  }
  func.func @transform_1(%arg0: i32) -> (i32, i32) {
    %c0_i32 = arith.constant 0 : i32
    %c0_i32_0 = arith.constant 0 : i32
    %c0_i32_1 = arith.constant 0 : i32
    return %c0_i32, %c0_i32_0 : i32, i32
  }
  func.func @transform_2(%arg0: i32) -> (i32, i32) {
    %c0_i32 = arith.constant 0 : i32
    %c0_i32_0 = arith.constant 0 : i32
    %c0_i32_1 = arith.constant 0 : i32
    return %c0_i32, %c0_i32_0 : i32, i32
  }
  func.func @transform_3(%arg0: i32) -> (i32, i32) {
    %c0_i32 = arith.constant 0 : i32
    %c0_i32_0 = arith.constant 0 : i32
    return %arg0, %c0_i32 : i32, i32
  }
}

module attributes {stable_mosaic.version = 11 : i64} {
  func.func @_mm_kernel(%arg0: i32, %arg1: memref<128x256xbf16, #tpu.memory_space<vmem>>, %arg2: memref<256x128xbf16, #tpu.memory_space<vmem>>, %arg3: memref<1x128xf32, #tpu.memory_space<vmem>>, %arg4: memref<128x128xf32, #tpu.memory_space<vmem>>) attributes {dimension_semantics = [#tpu.dimension_semantics<parallel>], iteration_bounds = array<i64: 1>, scalar_prefetch = 0 : i64, scratch_operands = 0 : i64, tpu.core_type = #tpu.core_type<tc>, window_params = [{transform_indices = @transform_0, window_bounds = array<i64: 128, 256>}, {pipeline_mode = #tpu.pipeline_mode<synchronous>, transform_indices = @transform_1, window_bounds = array<i64: 256, 128>}, {pipeline_mode = #tpu.pipeline_mode<synchronous>, transform_indices = @transform_2, window_bounds = array<i64: 1, 128>}, {transform_indices = @transform_3, window_bounds = array<i64: 128, 128>}]} {
    %c0 = arith.constant 0 : index
    %c0_0 = arith.constant 0 : index
    %0 = vector.load %arg1[%c0, %c0_0] : memref<128x256xbf16, #tpu.memory_space<vmem>>, vector<128x256xbf16>
    %c0_1 = arith.constant 0 : index
    %c0_2 = arith.constant 0 : index
    %1 = vector.load %arg2[%c0_1, %c0_2] : memref<256x128xbf16, #tpu.memory_space<vmem>>, vector<256x128xbf16>
    %cst = arith.constant dense<0.000000e+00> : vector<128x128xf32>
    %2 = tpu.matmul %0, %1, %cst {dimension_numbers = #tpu.dot_dimension_numbers<[1], [0], [0], [1], [0, 0, 1, 1], [], []>} : vector<128x256xbf16>, vector<256x128xbf16>, vector<128x128xf32> -> vector<128x128xf32>
    %c0_3 = arith.constant 0 : index
    %c0_4 = arith.constant 0 : index
    %3 = vector.load %arg3[%c0_3, %c0_4] : memref<1x128xf32, #tpu.memory_space<vmem>>, vector<1x128xf32>
    %4 = vector.broadcast %3 : vector<1x128xf32> to vector<128x128xf32>
    %5 = arith.addf %2, %4 : vector<128x128xf32>
    %6 = math.tanh %5 : vector<128x128xf32>
    %c0_5 = arith.constant 0 : index
    %c0_6 = arith.constant 0 : index
    %7 = vector.load %arg4[%c0_5, %c0_6] : memref<128x128xf32, #tpu.memory_space<vmem>>, vector<128x128xf32>
    tpu.vector_store %arg4[%c0_5, %c0_6], %6 {strides = array<i32>} : memref<128x128xf32, #tpu.memory_space<vmem>>, vector<128x128xf32>,
    return
  }
  func.func @transform_0(%arg0: i32) -> (i32, i32) {
    %c0_i32 = arith.constant 0 : i32
    %c0_i32_0 = arith.constant 0 : i32
    return %arg0, %c0_i32 : i32, i32
  }
  func.func @transform_1(%arg0: i32) -> (i32, i32) {
    %c0_i32 = arith.constant 0 : i32
    %c0_i32_0 = arith.constant 0 : i32
    %c0_i32_1 = arith.constant 0 : i32
    return %c0_i32, %c0_i32_0 : i32, i32
  }
  func.func @transform_2(%arg0: i32) -> (i32, i32) {
    %c0_i32 = arith.constant 0 : i32
    %c0_i32_0 = arith.constant 0 : i32
    %c0_i32_1 = arith.constant 0 : i32
    return %c0_i32, %c0_i32_0 : i32, i32
  }
  func.func @transform_3(%arg0: i32) -> (i32, i32) {
    %c0_i32 = arith.constant 0 : i32
    %c0_i32_0 = arith.constant 0 : i32
    return %arg0, %c0_i32 : i32, i32
  }
}

</mosaic_0001>

<llo_original>
// kernel: generator_forward.12
$region0: #{generator_forward.12}
  #allocation0 [shape = 'u32[]', space=smem, size = 0x4, offset = 0x4, fixed_abs, tag = 'smem constant byte address 0x4 - core index']
  #allocation1 [shape = 'u32[144,128]{1,0:T(1,128)}', space=vmem, size = 0x12000, scoped, tag = 'internal scratch']
  %s0 = inlined_call_operand.vmem [shape: bf16[128,16], index: 0, kind: input, shape index: {}]
  %s1 = inlined_call_operand.vmem [shape: bf16[16,64], index: 1, kind: input, shape index: {}]
  %s2 = inlined_call_operand.vmem [shape: f32[1,64], index: 2, kind: input, shape index: {}]
  %s3 = inlined_call_operand.vmem [shape: bf16[128,64], index: 3, kind: output, shape index: {}]
  %s4 = sld [smem:[#allocation0]]
  $region22: #{generator_forward.12} parent=0
    _
  %s6 = ssub.s32 1, %s4
  %s7 = scalar_select 0, %s6, %s4
  // Predicated region
  $region2: #{generator_forward.12} parent=0 // pred_check
    _
  $region3: #{generator_forward.12} parent=0 // pred_check_branch
    %9 = sbr.rel (0) target = $region5
  $region4: #{generator_forward.12} parent=0 // pred_region
    _
  $region5: #{generator_forward.12} parent=0 // pred_fallthru
    _
  // Predicated region
  $region6: #{generator_forward.12} parent=0 // pred_check
    _
  $region7: #{generator_forward.12} parent=0 // pred_check_branch
    %11 = sbr.rel (0) target = $region9
  $region8: #{generator_forward.12} parent=0 // pred_region
    _
  $region9: #{generator_forward.12} parent=0 // pred_fallthru
    _
  // Predicated region
  $region10: #{generator_forward.12} parent=0 // pred_check
    _
  $region11: #{generator_forward.12} parent=0 // pred_check_branch
    %13 = sbr.rel (0) target = $region13
  $region12: #{generator_forward.12} parent=0 // pred_region
    _
  $region13: #{generator_forward.12} parent=0 // pred_fallthru
    _
  %v15 = vld [vmem:[%s0] sm:$0xf]
  %v16 = vld [vmem:[%s0 + $0x4] sm:$0xf]
  %v17 = vld [vmem:[%s0 + $0x8] sm:$0xf]
  %v18 = vld [vmem:[%s0 + $0xc] sm:$0xf]
  %v19 = vld [vmem:[%s0 + $0x10] sm:$0xf]
  %v20 = vld [vmem:[%s0 + $0x14] sm:$0xf]
  %v21 = vld [vmem:[%s0 + $0x18] sm:$0xf]
  %v22 = vld [vmem:[%s0 + $0x1c] sm:$0xf]
  %v23 = vld [vmem:[%s0 + $0x20] sm:$0xf]
  %v24 = vld [vmem:[%s0 + $0x24] sm:$0xf]
  %v25 = vld [vmem:[%s0 + $0x28] sm:$0xf]
  %v26 = vld [vmem:[%s0 + $0x2c] sm:$0xf]
  %v27 = vld [vmem:[%s0 + $0x30] sm:$0xf]
  %v28 = vld [vmem:[%s0 + $0x34] sm:$0xf]
  %v29 = vld [vmem:[%s0 + $0x38] sm:$0xf]
  %v30 = vld [vmem:[%s0 + $0x3c] sm:$0xf]
  %v31 = vld [vmem:[%s1] sm:$0xf]
  %v32 = vld [vmem:[%s1 + $0x4] sm:$0xf]
  %v33 = vld [vmem:[%s2] sm:$0x1]
  %v35 = vlaneseq
  %v36 = vshrl.u32 %v35, 7
  %v37 = vsub.s32 0, %v36
  %v38 = vrot.slane %v33, %v37
  %v56 = vunpack.c.l.b16 %v15
  %v57 = vunpack.c.l.b16 %v16
  %v58 = vunpack.c.l.b16 %v17
  %v59 = vunpack.c.l.b16 %v18
  %v60 = vunpack.c.l.b16 %v19
  %v61 = vunpack.c.l.b16 %v20
  %v62 = vunpack.c.l.b16 %v21
  %v63 = vunpack.c.l.b16 %v22
  %v64 = vunpack.c.l.b16 %v23
  %v65 = vunpack.c.l.b16 %v24
  %v66 = vunpack.c.l.b16 %v25
  %v67 = vunpack.c.l.b16 %v26
  %v68 = vunpack.c.l.b16 %v27
  %v69 = vunpack.c.l.b16 %v28
  %v70 = vunpack.c.l.b16 %v29
  %v71 = vunpack.c.l.b16 %v30
  %v72 = vpack.c.b16 %v57, %v56
  %v73 = vpack.c.b16 %v59, %v58
  %v74 = vpack.c.b16 %v61, %v60
  %v75 = vpack.c.b16 %v63, %v62
  %v76 = vpack.c.b16 %v65, %v64
  %v77 = vpack.c.b16 %v67, %v66
  %v78 = vpack.c.b16 %v69, %v68
  %v79 = vpack.c.b16 %v71, %v70
  %v82 = vunpack.c.l.b16 %v31
  %v83 = vunpack.c.l.b16 %v32
  %v84 = vpack.c.b16 %v83, %v82
  %vm86 = vcmask 130048
  %v88 = vsel %vm86, %v72, 0
  %v91 = vsel %vm86, %v73, 0
  %v94 = vsel %vm86, %v74, 0
  %v97 = vsel %vm86, %v75, 0
  %v100 = vsel %vm86, %v76, 0
  %v103 = vsel %vm86, %v77, 0
  %v106 = vsel %vm86, %v78, 0
  %v109 = vsel %vm86, %v79, 0
  %111 = vmatprep.subr.bf16.mxu0 0
  %112 = vmatpush1.bf16.msra.mxu0 %v84
  %113 = vmatprep.subr.bf16.mxu0 0
  %114 = vmatpush1.bf16.msra.mxu0 0
  %115 = vmatprep.subr.bf16.mxu0 0
  %116 = vmatpush1.bf16.msra.mxu0 0
  %117 = vmatprep.subr.bf16.mxu0 0
  %118 = vmatpush1.bf16.msra.mxu0 0
  %119 = vmatprep.subr.bf16.mxu0 0
  %120 = vmatpush1.bf16.msra.mxu0 0
  %121 = vmatprep.subr.bf16.mxu0 0
  %122 = vmatpush1.bf16.msra.mxu0 0
  %123 = vmatprep.subr.bf16.mxu0 0
  %124 = vmatpush1.bf16.msra.mxu0 0
  %125 = vmatprep.subr.bf16.mxu0 0
  %126 = vmatpush1.bf16.msra.mxu0 0
  %127 = vmatprep.subr.bf16.mxu0 0
  %128 = vmatpush1.bf16.msra.mxu0 0
  %129 = vmatprep.subr.bf16.mxu0 0
  %130 = vmatpush1.bf16.msra.mxu0 0
  %131 = vmatprep.subr.bf16.mxu0 0
  %132 = vmatpush1.bf16.msra.mxu0 0
  %133 = vmatprep.subr.bf16.mxu0 0
  %134 = vmatpush1.bf16.msra.mxu0 0
  %135 = vmatprep.subr.bf16.mxu0 0
  %136 = vmatpush1.bf16.msra.mxu0 0
  %137 = vmatprep.subr.bf16.mxu0 0
  %138 = vmatpush1.bf16.msra.mxu0 0
  %139 = vmatprep.subr.bf16.mxu0 0
  %140 = vmatpush1.bf16.msra.mxu0 0
  %141 = vmatprep.subr.bf16.mxu0 0
  %142 = vmatpush1.bf16.msra.mxu0 0
  %143 = vmatprep.mubr.bf16.mxu0 0
  %144 = vmatmul.mubr.bf16.gmra.mrb[0].mxu0 %v88
  %v145 = vpop.f32.mrb[0].mxu0
  %v146 = vadd.f32 %v38, %v145
  %v147 = vpop.f32.mrb[0].mxu0
  %v148 = vpop.f32.mrb[0].mxu0
  %v149 = vadd.f32 %v38, %v148
  %v150 = vpop.f32.mrb[0].mxu0
  %151 = vmatprep.mubr.bf16.mxu0 0
  %152 = vmatmul.mubr.bf16.gmra.mrb[0].mxu0 %v91
  %v153 = vpop.f32.mrb[0].mxu0
  %v154 = vadd.f32 %v38, %v153
  %v155 = vpop.f32.mrb[0].mxu0
  %v156 = vpop.f32.mrb[0].mxu0
  %v157 = vadd.f32 %v38, %v156
  %v158 = vpop.f32.mrb[0].mxu0
  %159 = vmatprep.mubr.bf16.mxu0 0
  %160 = vmatmul.mubr.bf16.gmra.mrb[0].mxu0 %v94
  %v161 = vpop.f32.mrb[0].mxu0
  %v162 = vadd.f32 %v38, %v161
  %v163 = vpop.f32.mrb[0].mxu0
  %v164 = vpop.f32.mrb[0].mxu0
  %v165 = vadd.f32 %v38, %v164
  %v166 = vpop.f32.mrb[0].mxu0
  %167 = vmatprep.mubr.bf16.mxu0 0
  %168 = vmatmul.mubr.bf16.gmra.mrb[0].mxu0 %v97
  %v169 = vpop.f32.mrb[0].mxu0
  %v170 = vadd.f32 %v38, %v169
  %v171 = vpop.f32.mrb[0].mxu0
  %v172 = vpop.f32.mrb[0].mxu0
  %v173 = vadd.f32 %v38, %v172
  %v174 = vpop.f32.mrb[0].mxu0
  %175 = vmatprep.mubr.bf16.mxu0 0
  %176 = vmatmul.mubr.bf16.gmra.mrb[0].mxu0 %v100
  %v177 = vpop.f32.mrb[0].mxu0
  %v178 = vadd.f32 %v38, %v177
  %v179 = vpop.f32.mrb[0].mxu0
  %v180 = vpop.f32.mrb[0].mxu0
  %v181 = vadd.f32 %v38, %v180
  %v182 = vpop.f32.mrb[0].mxu0
  %183 = vmatprep.mubr.bf16.mxu0 0
  %184 = vmatmul.mubr.bf16.gmra.mrb[0].mxu0 %v103
  %v185 = vpop.f32.mrb[0].mxu0
  %v186 = vadd.f32 %v38, %v185
  %v187 = vpop.f32.mrb[0].mxu0
  %v188 = vpop.f32.mrb[0].mxu0
  %v189 = vadd.f32 %v38, %v188
  %v190 = vpop.f32.mrb[0].mxu0
  %191 = vmatprep.mubr.bf16.mxu0 0
  %192 = vmatmul.mubr.bf16.gmra.mrb[0].mxu0 %v106
  %v193 = vpop.f32.mrb[0].mxu0
  %v194 = vadd.f32 %v38, %v193
  %v195 = vpop.f32.mrb[0].mxu0
  %v196 = vpop.f32.mrb[0].mxu0
  %v197 = vadd.f32 %v38, %v196
  %v198 = vpop.f32.mrb[0].mxu0
  %199 = vmatprep.mubr.bf16.mxu0 0
  %200 = vmatmul.mubr.bf16.gmra.mrb[0].mxu0 %v109
  %v201 = vpop.f32.mrb[0].mxu0
  %v202 = vadd.f32 %v38, %v201
  %v203 = vpop.f32.mrb[0].mxu0
  %v204 = vpop.f32.mrb[0].mxu0
  %v205 = vadd.f32 %v38, %v204
  %v206 = vpop.f32.mrb[0].mxu0
  %207 = vdwg.mxu0
  %vm208 = vcmp.ge.f32.partialorder %v146, 0.0
  %vm209 = vcmp.ge.f32.partialorder %v149, 0.0
  %vm210 = vcmp.ge.f32.partialorder %v154, 0.0
  %vm211 = vcmp.ge.f32.partialorder %v157, 0.0
  %vm212 = vcmp.ge.f32.partialorder %v162, 0.0
  %vm213 = vcmp.ge.f32.partialorder %v165, 0.0
  %vm214 = vcmp.ge.f32.partialorder %v170, 0.0
  %vm215 = vcmp.ge.f32.partialorder %v173, 0.0
  %vm216 = vcmp.ge.f32.partialorder %v178, 0.0
  %vm217 = vcmp.ge.f32.partialorder %v181, 0.0
  %vm218 = vcmp.ge.f32.partialorder %v186, 0.0
  %vm219 = vcmp.ge.f32.partialorder %v189, 0.0
  %vm220 = vcmp.ge.f32.partialorder %v194, 0.0
  %vm221 = vcmp.ge.f32.partialorder %v197, 0.0
  %vm222 = vcmp.ge.f32.partialorder %v202, 0.0
  %vm223 = vcmp.ge.f32.partialorder %v205, 0.0
  %v224 = vmul.f32 %v146, 0.2
  %v225 = vmul.f32 %v149, 0.2
  %v226 = vmul.f32 %v154, 0.2
  %v227 = vmul.f32 %v157, 0.2
  %v228 = vmul.f32 %v162, 0.2
  %v229 = vmul.f32 %v165, 0.2
  %v230 = vmul.f32 %v170, 0.2
  %v231 = vmul.f32 %v173, 0.2
  %v232 = vmul.f32 %v178, 0.2
  %v233 = vmul.f32 %v181, 0.2
  %v234 = vmul.f32 %v186, 0.2
  %v235 = vmul.f32 %v189, 0.2
  %v236 = vmul.f32 %v194, 0.2
  %v237 = vmul.f32 %v197, 0.2
  %v238 = vmul.f32 %v202, 0.2
  %v239 = vmul.f32 %v205, 0.2
  %v240 = vsel %vm208, %v146, %v224
  %v241 = vsel %vm209, %v149, %v225
  %v242 = vsel %vm210, %v154, %v226
  %v243 = vsel %vm211, %v157, %v227
  %v244 = vsel %vm212, %v162, %v228
  %v245 = vsel %vm213, %v165, %v229
  %v246 = vsel %vm214, %v170, %v230
  %v247 = vsel %vm215, %v173, %v231
  %v248 = vsel %vm216, %v178, %v232
  %v249 = vsel %vm217, %v181, %v233
  %v250 = vsel %vm218, %v186, %v234
  %v251 = vsel %vm219, %v189, %v235
  %v252 = vsel %vm220, %v194, %v236
  %v253 = vsel %vm221, %v197, %v237
  %v254 = vsel %vm222, %v202, %v238
  %v255 = vsel %vm223, %v205, %v239
  %v256 = vpack.c.bf16 %v241, %v240
  %v257 = vpack.c.bf16 %v243, %v242
  %v258 = vpack.c.bf16 %v245, %v244
  %v259 = vpack.c.bf16 %v247, %v246
  %v260 = vpack.c.bf16 %v249, %v248
  %v261 = vpack.c.bf16 %v251, %v250
  %v262 = vpack.c.bf16 %v253, %v252
  %v263 = vpack.c.bf16 %v255, %v254
  %v272 = vunpack.c.l.b16 %v256
  %v273 = vunpack.c.h.b16 %v256
  %v274 = vunpack.c.l.b16 %v257
  %v275 = vunpack.c.h.b16 %v257
  %v276 = vunpack.c.l.b16 %v258
  %v277 = vunpack.c.h.b16 %v258
  %v278 = vunpack.c.l.b16 %v259
  %v279 = vunpack.c.h.b16 %v259
  %v280 = vunpack.c.l.b16 %v260
  %v281 = vunpack.c.h.b16 %v260
  %v282 = vunpack.c.l.b16 %v261
  %v283 = vunpack.c.h.b16 %v261
  %v284 = vunpack.c.l.b16 %v262
  %v285 = vunpack.c.h.b16 %v262
  %v286 = vunpack.c.l.b16 %v263
  %v287 = vunpack.c.h.b16 %v263
  %v288 = vpack.c.b16 %v272, %v272
  %v289 = vpack.c.b16 %v273, %v273
  %v290 = vpack.c.b16 %v274, %v274
  %v291 = vpack.c.b16 %v275, %v275
  %v292 = vpack.c.b16 %v276, %v276
  %v293 = vpack.c.b16 %v277, %v277
  %v294 = vpack.c.b16 %v278, %v278
  %v295 = vpack.c.b16 %v279, %v279
  %v296 = vpack.c.b16 %v280, %v280
  %v297 = vpack.c.b16 %v281, %v281
  %v298 = vpack.c.b16 %v282, %v282
  %v299 = vpack.c.b16 %v283, %v283
  %v300 = vpack.c.b16 %v284, %v284
  %v301 = vpack.c.b16 %v285, %v285
  %v302 = vpack.c.b16 %v286, %v286
  %v303 = vpack.c.b16 %v287, %v287
  %vm320 = vcmask 519168
  %321 = vst.msk [vmem:[%s3] sm:$0xf] %vm320, %v288
  %322 = vst.msk [vmem:[%s3 + $0x4] sm:$0xf] %vm320, %v289
  %323 = vst.msk [vmem:[%s3 + $0x8] sm:$0xf] %vm320, %v290
  %324 = vst.msk [vmem:[%s3 + $0xc] sm:$0xf] %vm320, %v291
  %325 = vst.msk [vmem:[%s3 + $0x10] sm:$0xf] %vm320, %v292
  %326 = vst.msk [vmem:[%s3 + $0x14] sm:$0xf] %vm320, %v293
  %327 = vst.msk [vmem:[%s3 + $0x18] sm:$0xf] %vm320, %v294
  %328 = vst.msk [vmem:[%s3 + $0x1c] sm:$0xf] %vm320, %v295
  %329 = vst.msk [vmem:[%s3 + $0x20] sm:$0xf] %vm320, %v296
  %330 = vst.msk [vmem:[%s3 + $0x24] sm:$0xf] %vm320, %v297
  %331 = vst.msk [vmem:[%s3 + $0x28] sm:$0xf] %vm320, %v298
  %332 = vst.msk [vmem:[%s3 + $0x2c] sm:$0xf] %vm320, %v299
  %333 = vst.msk [vmem:[%s3 + $0x30] sm:$0xf] %vm320, %v300
  %334 = vst.msk [vmem:[%s3 + $0x34] sm:$0xf] %vm320, %v301
  %335 = vst.msk [vmem:[%s3 + $0x38] sm:$0xf] %vm320, %v302
  %336 = vst.msk [vmem:[%s3 + $0x3c] sm:$0xf] %vm320, %v303
  // Predicated region
  $region14: #{generator_forward.12} parent=0 // pred_check
    _
  $region15: #{generator_forward.12} parent=0 // pred_check_branch
    %338 = sbr.rel (0) target = $region17
  $region16: #{generator_forward.12} parent=0 // pred_region
    _
  $region17: #{generator_forward.12} parent=0 // pred_fallthru
    _
  // Predicated region
  $region18: #{generator_forward.12} parent=0 // pred_check
    _
  $region19: #{generator_forward.12} parent=0 // pred_check_branch
    %340 = sbr.rel (0) target = $region21
  $region20: #{generator_forward.12} parent=0 // pred_region
    _
  $region21: #{generator_forward.12} parent=0 // pred_fallthru
    _

// kernel: generator_forward.14
$region0: #{generator_forward.14}
  #allocation0 [shape = 'u32[]', space=smem, size = 0x4, offset = 0x4, fixed_abs, tag = 'smem constant byte address 0x4 - core index']
  #allocation1 [shape = 'u32[144,128]{1,0:T(1,128)}', space=vmem, size = 0x12000, scoped, tag = 'internal scratch']
  %s0 = inlined_call_operand.vmem [shape: bf16[32,128], index: 0, kind: input, shape index: {}]
  %s1 = inlined_call_operand.vmem [shape: f32[1,128], index: 1, kind: input, shape index: {}]
  %s2 = inlined_call_operand.vmem [shape: f32[1,128], index: 2, kind: input, shape index: {}]
  %s3 = inlined_call_operand.vmem [shape: bf16[32,128], index: 3, kind: output, shape index: {}]
  %s4 = sld [smem:[#allocation0]]
  $region22: #{generator_forward.14} parent=0
    _
  %s6 = ssub.s32 1, %s4
  %s7 = scalar_select 0, %s6, %s4
  // Predicated region
  $region2: #{generator_forward.14} parent=0 // pred_check
    _
  $region3: #{generator_forward.14} parent=0 // pred_check_branch
    %9 = sbr.rel (0) target = $region5
  $region4: #{generator_forward.14} parent=0 // pred_region
    _
  $region5: #{generator_forward.14} parent=0 // pred_fallthru
    _
  // Predicated region
  $region6: #{generator_forward.14} parent=0 // pred_check
    _
  $region7: #{generator_forward.14} parent=0 // pred_check_branch
    %11 = sbr.rel (0) target = $region9
  $region8: #{generator_forward.14} parent=0 // pred_region
    _
  $region9: #{generator_forward.14} parent=0 // pred_fallthru
    _
  // Predicated region
  $region10: #{generator_forward.14} parent=0 // pred_check
    _
  $region11: #{generator_forward.14} parent=0 // pred_check_branch
    %13 = sbr.rel (0) target = $region13
  $region12: #{generator_forward.14} parent=0 // pred_region
    _
  $region13: #{generator_forward.14} parent=0 // pred_fallthru
    _
  %v14 = vld [vmem:[%s0] sm:$0xf]
  %v15 = vld [vmem:[%s0 + $0x4] sm:$0xf]
  %v16 = vld [vmem:[%s0 + $0x8] sm:$0xf]
  %v17 = vld [vmem:[%s0 + $0xc] sm:$0xf]
  %v18 = vunpack.c.l.bf16 %v14
  %v19 = vunpack.c.l.bf16 %v15
  %v20 = vunpack.c.l.bf16 %v16
  %v21 = vunpack.c.l.bf16 %v17
  %v22 = vld [vmem:[%s1] sm:$0x1]
  %v24 = vlaneseq
  %v25 = vshrl.u32 %v24, 7
  %v26 = vsub.s32 0, %v25
  %v27 = vrot.slane %v22, %v26
  %v29 = vmul.f32 %v18, %v27
  %v30 = vmul.f32 %v19, %v27
  %v31 = vmul.f32 %v20, %v27
  %v32 = vmul.f32 %v21, %v27
  %v33 = vld [vmem:[%s2] sm:$0x1]
  %v35 = vlaneseq
  %v36 = vshrl.u32 %v35, 7
  %v37 = vsub.s32 0, %v36
  %v38 = vrot.slane %v33, %v37
  %v40 = vadd.f32 %v29, %v38
  %v41 = vadd.f32 %v30, %v38
  %v42 = vadd.f32 %v31, %v38
  %v43 = vadd.f32 %v32, %v38
  %vm44 = vcmp.ge.f32.partialorder %v40, 0.0
  %vm45 = vcmp.ge.f32.partialorder %v41, 0.0
  %vm46 = vcmp.ge.f32.partialorder %v42, 0.0
  %vm47 = vcmp.ge.f32.partialorder %v43, 0.0
  %v48 = vmul.f32 %v40, 0.2
  %v49 = vmul.f32 %v41, 0.2
  %v50 = vmul.f32 %v42, 0.2
  %v51 = vmul.f32 %v43, 0.2
  %v52 = vsel %vm44, %v40, %v48
  %v53 = vsel %vm45, %v41, %v49
  %v54 = vsel %vm46, %v42, %v50
  %v55 = vsel %vm47, %v43, %v51
  %v56 = vpack.c.bf16 %v53, %v52
  %v57 = vpack.c.bf16 %v55, %v54
  %v60 = vunpack.c.l.b16 %v56
  %v61 = vunpack.c.h.b16 %v56
  %v62 = vunpack.c.l.b16 %v57
  %v63 = vunpack.c.h.b16 %v57
  %v64 = vpack.c.b16 %v60, %v60
  %v65 = vpack.c.b16 %v61, %v61
  %v66 = vpack.c.b16 %v62, %v62
  %v67 = vpack.c.b16 %v63, %v63
  %72 = vst [vmem:[%s3] sm:$0xf] %v64
  %73 = vst [vmem:[%s3 + $0x4] sm:$0xf] %v65
  %74 = vst [vmem:[%s3 + $0x8] sm:$0xf] %v66
  %75 = vst [vmem:[%s3 + $0xc] sm:$0xf] %v67
  // Predicated region
  $region14: #{generator_forward.14} parent=0 // pred_check
    _
  $region15: #{generator_forward.14} parent=0 // pred_check_branch
    %77 = sbr.rel (0) target = $region17
  $region16: #{generator_forward.14} parent=0 // pred_region
    _
  $region17: #{generator_forward.14} parent=0 // pred_fallthru
    _
  // Predicated region
  $region18: #{generator_forward.14} parent=0 // pred_check
    _
  $region19: #{generator_forward.14} parent=0 // pred_check_branch
    %79 = sbr.rel (0) target = $region21
  $region20: #{generator_forward.14} parent=0 // pred_region
    _
  $region21: #{generator_forward.14} parent=0 // pred_fallthru
    _

// kernel: generator_forward.13
$region0: #{generator_forward.13}
  #allocation0 [shape = 'u32[]', space=smem, size = 0x4, offset = 0x4, fixed_abs, tag = 'smem constant byte address 0x4 - core index']
  #allocation1 [shape = 'u32[144,128]{1,0:T(1,128)}', space=vmem, size = 0x12000, scoped, tag = 'internal scratch']
  %s0 = inlined_call_operand.vmem [shape: bf16[32,1024], index: 0, kind: input, shape index: {}]
  %s1 = inlined_call_operand.vmem [shape: bf16[1024,128], index: 1, kind: input, shape index: {}]
  %s2 = inlined_call_operand.vmem [shape: f32[1,128], index: 2, kind: input, shape index: {}]
  %s3 = inlined_call_operand.vmem [shape: bf16[32,128], index: 3, kind: output, shape index: {0}]
  %s4 = inlined_call_operand.vmem [shape: f32[8,128], index: 4, kind: output, shape index: {1}]
  %s5 = inlined_call_operand.vmem [shape: f32[8,128], index: 5, kind: output, shape index: {2}]
  %6 = xla_tuple %s3, %s4, %s5
  %s7 = sld [smem:[#allocation0]]
  $region38: #{generator_forward.13} parent=0
    _
  %s9 = ssub.s32 1, %s7
  %s10 = scalar_select 0, %s9, %s7
  // Predicated region
  $region2: #{generator_forward.13} parent=0 // pred_check
    _
  $region3: #{generator_forward.13} parent=0 // pred_check_branch
    %12 = sbr.rel (0) target = $region5
  $region4: #{generator_forward.13} parent=0 // pred_region
    _
  $region5: #{generator_forward.13} parent=0 // pred_fallthru
    _
  // Predicated region
  $region6: #{generator_forward.13} parent=0 // pred_check
    _
  $region7: #{generator_forward.13} parent=0 // pred_check_branch
    %14 = sbr.rel (0) target = $region9
  $region8: #{generator_forward.13} parent=0 // pred_region
    _
  $region9: #{generator_forward.13} parent=0 // pred_fallthru
    _
  // Predicated region
  $region10: #{generator_forward.13} parent=0 // pred_check
    _
  $region11: #{generator_forward.13} parent=0 // pred_check_branch
    %16 = sbr.rel (0) target = $region13
  $region12: #{generator_forward.13} parent=0 // pred_region
    _
  $region13: #{generator_forward.13} parent=0 // pred_fallthru
    _
  %v18 = vld [vmem:[%s0] sm:$0xff]
  %v19 = vld [vmem:[%s0 + $0x8] sm:$0xff]
  %v20 = vld [vmem:[%s0 + $0x10] sm:$0xff]
  %v21 = vld [vmem:[%s0 + $0x18] sm:$0xff]
  %v22 = vld [vmem:[%s0 + $0x20] sm:$0xff]
  %v23 = vld [vmem:[%s0 + $0x28] sm:$0xff]
  %v24 = vld [vmem:[%s0 + $0x30] sm:$0xff]
  %v25 = vld [vmem:[%s0 + $0x38] sm:$0xff]
  %v26 = vld [vmem:[%s0 + $0x40] sm:$0xff]
  %v27 = vld [vmem:[%s0 + $0x48] sm:$0xff]
  %v28 = vld [vmem:[%s0 + $0x50] sm:$0xff]
  %v29 = vld [vmem:[%s0 + $0x58] sm:$0xff]
  %v30 = vld [vmem:[%s0 + $0x60] sm:$0xff]
  %v31 = vld [vmem:[%s0 + $0x68] sm:$0xff]
  %v32 = vld [vmem:[%s0 + $0x70] sm:$0xff]
  %v33 = vld [vmem:[%s0 + $0x78] sm:$0xff]
  %v34 = vld [vmem:[%s1] sm:$0xf]
  %v35 = vld [vmem:[%s1 + $0x4] sm:$0xf]
  %v36 = vld [vmem:[%s1 + $0x8] sm:$0xf]
  %v37 = vld [vmem:[%s1 + $0xc] sm:$0xf]
  %v38 = vld [vmem:[%s1 + $0x10] sm:$0xf]
  %v39 = vld [vmem:[%s1 + $0x14] sm:$0xf]
  %v40 = vld [vmem:[%s1 + $0x18] sm:$0xf]
  %v41 = vld [vmem:[%s1 + $0x1c] sm:$0xf]
  %v42 = vld [vmem:[%s1 + $0x20] sm:$0xf]
  %v43 = vld [vmem:[%s1 + $0x24] sm:$0xf]
  %v44 = vld [vmem:[%s1 + $0x28] sm:$0xf]
  %v45 = vld [vmem:[%s1 + $0x2c] sm:$0xf]
  %v46 = vld [vmem:[%s1 + $0x30] sm:$0xf]
  %v47 = vld [vmem:[%s1 + $0x34] sm:$0xf]
  %v48 = vld [vmem:[%s1 + $0x38] sm:$0xf]
  %v49 = vld [vmem:[%s1 + $0x3c] sm:$0xf]
  %v50 = vld [vmem:[%s1 + $0x40] sm:$0xf]
  %v51 = vld [vmem:[%s1 + $0x44] sm:$0xf]
  %v52 = vld [vmem:[%s1 + $0x48] sm:$0xf]
  %v53 = vld [vmem:[%s1 + $0x4c] sm:$0xf]
  %v54 = vld [vmem:[%s1 + $0x50] sm:$0xf]
  %v55 = vld [vmem:[%s1 + $0x54] sm:$0xf]
  %v56 = vld [vmem:[%s1 + $0x58] sm:$0xf]
  %v57 = vld [vmem:[%s1 + $0x5c] sm:$0xf]
  %v58 = vld [vmem:[%s1 + $0x60] sm:$0xf]
  %v59 = vld [vmem:[%s1 + $0x64] sm:$0xf]
  %v60 = vld [vmem:[%s1 + $0x68] sm:$0xf]
  %v61 = vld [vmem:[%s1 + $0x6c] sm:$0xf]
  %v62 = vld [vmem:[%s1 + $0x70] sm:$0xf]
  %v63 = vld [vmem:[%s1 + $0x74] sm:$0xf]
  %v64 = vld [vmem:[%s1 + $0x78] sm:$0xf]
  %v65 = vld [vmem:[%s1 + $0x7c] sm:$0xf]
  %v66 = vld [vmem:[%s1 + $0x80] sm:$0xf]
  %v67 = vld [vmem:[%s1 + $0x84] sm:$0xf]
  %v68 = vld [vmem:[%s1 + $0x88] sm:$0xf]
  %v69 = vld [vmem:[%s1 + $0x8c] sm:$0xf]
  %v70 = vld [vmem:[%s1 + $0x90] sm:$0xf]
  %v71 = vld [vmem:[%s1 + $0x94] sm:$0xf]
  %v72 = vld [vmem:[%s1 + $0x98] sm:$0xf]
  %v73 = vld [vmem:[%s1 + $0x9c] sm:$0xf]
  %v74 = vld [vmem:[%s1 + $0xa0] sm:$0xf]
  %v75 = vld [vmem:[%s1 + $0xa4] sm:$0xf]
  %v76 = vld [vmem:[%s1 + $0xa8] sm:$0xf]
  %v77 = vld [vmem:[%s1 + $0xac] sm:$0xf]
  %v78 = vld [vmem:[%s1 + $0xb0] sm:$0xf]
  %v79 = vld [vmem:[%s1 + $0xb4] sm:$0xf]
  %v80 = vld [vmem:[%s1 + $0xb8] sm:$0xf]
  %v81 = vld [vmem:[%s1 + $0xbc] sm:$0xf]
  %v82 = vld [vmem:[%s1 + $0xc0] sm:$0xf]
  %v83 = vld [vmem:[%s1 + $0xc4] sm:$0xf]
  %v84 = vld [vmem:[%s1 + $0xc8] sm:$0xf]
  %v85 = vld [vmem:[%s1 + $0xcc] sm:$0xf]
  %v86 = vld [vmem:[%s1 + $0xd0] sm:$0xf]
  %v87 = vld [vmem:[%s1 + $0xd4] sm:$0xf]
  %v88 = vld [vmem:[%s1 + $0xd8] sm:$0xf]
  %v89 = vld [vmem:[%s1 + $0xdc] sm:$0xf]
  %v90 = vld [vmem:[%s1 + $0xe0] sm:$0xf]
  %v91 = vld [vmem:[%s1 + $0xe4] sm:$0xf]
  %v92 = vld [vmem:[%s1 + $0xe8] sm:$0xf]
  %v93 = vld [vmem:[%s1 + $0xec] sm:$0xf]
  %v94 = vld [vmem:[%s1 + $0xf0] sm:$0xf]
  %v95 = vld [vmem:[%s1 + $0xf4] sm:$0xf]
  %v96 = vld [vmem:[%s1 + $0xf8] sm:$0xf]
  %v97 = vld [vmem:[%s1 + $0xfc] sm:$0xf]
  %v98 = vld [vmem:[%s1 + $0x100] sm:$0xf]
  %v99 = vld [vmem:[%s1 + $0x104] sm:$0xf]
  %v100 = vld [vmem:[%s1 + $0x108] sm:$0xf]
  %v101 = vld [vmem:[%s1 + $0x10c] sm:$0xf]
  %v102 = vld [vmem:[%s1 + $0x110] sm:$0xf]
  %v103 = vld [vmem:[%s1 + $0x114] sm:$0xf]
  %v104 = vld [vmem:[%s1 + $0x118] sm:$0xf]
  %v105 = vld [vmem:[%s1 + $0x11c] sm:$0xf]
  %v106 = vld [vmem:[%s1 + $0x120] sm:$0xf]
  %v107 = vld [vmem:[%s1 + $0x124] sm:$0xf]
  %v108 = vld [vmem:[%s1 + $0x128] sm:$0xf]
  %v109 = vld [vmem:[%s1 + $0x12c] sm:$0xf]
  %v110 = vld [vmem:[%s1 + $0x130] sm:$0xf]
  %v111 = vld [vmem:[%s1 + $0x134] sm:$0xf]
  %v112 = vld [vmem:[%s1 + $0x138] sm:$0xf]
  %v113 = vld [vmem:[%s1 + $0x13c] sm:$0xf]
  %v114 = vld [vmem:[%s1 + $0x140] sm:$0xf]
  %v115 = vld [vmem:[%s1 + $0x144] sm:$0xf]
  %v116 = vld [vmem:[%s1 + $0x148] sm:$0xf]
  %v117 = vld [vmem:[%s1 + $0x14c] sm:$0xf]
  %v118 = vld [vmem:[%s1 + $0x150] sm:$0xf]
  %v119 = vld [vmem:[%s1 + $0x154] sm:$0xf]
  %v120 = vld [vmem:[%s1 + $0x158] sm:$0xf]
  %v121 = vld [vmem:[%s1 + $0x15c] sm:$0xf]
  %v122 = vld [vmem:[%s1 + $0x160] sm:$0xf]
  %v123 = vld [vmem:[%s1 + $0x164] sm:$0xf]
  %v124 = vld [vmem:[%s1 + $0x168] sm:$0xf]
  %v125 = vld [vmem:[%s1 + $0x16c] sm:$0xf]
  %v126 = vld [vmem:[%s1 + $0x170] sm:$0xf]
  %v127 = vld [vmem:[%s1 + $0x174] sm:$0xf]
  %v128 = vld [vmem:[%s1 + $0x178] sm:$0xf]
  %v129 = vld [vmem:[%s1 + $0x17c] sm:$0xf]
  %v130 = vld [vmem:[%s1 + $0x180] sm:$0xf]
  %v131 = vld [vmem:[%s1 + $0x184] sm:$0xf]
  %v132 = vld [vmem:[%s1 + $0x188] sm:$0xf]
  %v133 = vld [vmem:[%s1 + $0x18c] sm:$0xf]
  %v134 = vld [vmem:[%s1 + $0x190] sm:$0xf]
  %v135 = vld [vmem:[%s1 + $0x194] sm:$0xf]
  %v136 = vld [vmem:[%s1 + $0x198] sm:$0xf]
  %v137 = vld [vmem:[%s1 + $0x19c] sm:$0xf]
  %v138 = vld [vmem:[%s1 + $0x1a0] sm:$0xf]
  %v139 = vld [vmem:[%s1 + $0x1a4] sm:$0xf]
  %v140 = vld [vmem:[%s1 + $0x1a8] sm:$0xf]
  %v141 = vld [vmem:[%s1 + $0x1ac] sm:$0xf]
  %v142 = vld [vmem:[%s1 + $0x1b0] sm:$0xf]
  %v143 = vld [vmem:[%s1 + $0x1b4] sm:$0xf]
  %v144 = vld [vmem:[%s1 + $0x1b8] sm:$0xf]
  %v145 = vld [vmem:[%s1 + $0x1bc] sm:$0xf]
  %v146 = vld [vmem:[%s1 + $0x1c0] sm:$0xf]
  %v147 = vld [vmem:[%s1 + $0x1c4] sm:$0xf]
  %v148 = vld [vmem:[%s1 + $0x1c8] sm:$0xf]
  %v149 = vld [vmem:[%s1 + $0x1cc] sm:$0xf]
  %v150 = vld [vmem:[%s1 + $0x1d0] sm:$0xf]
  %v151 = vld [vmem:[%s1 + $0x1d4] sm:$0xf]
  %v152 = vld [vmem:[%s1 + $0x1d8] sm:$0xf]
  %v153 = vld [vmem:[%s1 + $0x1dc] sm:$0xf]
  %v154 = vld [vmem:[%s1 + $0x1e0] sm:$0xf]
  %v155 = vld [vmem:[%s1 + $0x1e4] sm:$0xf]
  %v156 = vld [vmem:[%s1 + $0x1e8] sm:$0xf]
  %v157 = vld [vmem:[%s1 + $0x1ec] sm:$0xf]
  %v158 = vld [vmem:[%s1 + $0x1f0] sm:$0xf]
  %v159 = vld [vmem:[%s1 + $0x1f4] sm:$0xf]
  %v160 = vld [vmem:[%s1 + $0x1f8] sm:$0xf]
  %v161 = vld [vmem:[%s1 + $0x1fc] sm:$0xf]
  %v162 = vld [vmem:[%s2] sm:$0x1]
  %v164 = vlaneseq
  %v165 = vshrl.u32 %v164, 7
  %v166 = vsub.s32 0, %v165
  %v167 = vrot.slane %v162, %v166
  %v185 = vunpack.c.l.b16 %v18
  %v186 = vunpack.c.h.b16 %v18
  %v187 = vunpack.c.l.b16 %v19
  %v188 = vunpack.c.h.b16 %v19
  %v189 = vunpack.c.l.b16 %v20
  %v190 = vunpack.c.h.b16 %v20
  %v191 = vunpack.c.l.b16 %v21
  %v192 = vunpack.c.h.b16 %v21
  %v193 = vunpack.c.l.b16 %v22
  %v194 = vunpack.c.h.b16 %v22
  %v195 = vunpack.c.l.b16 %v23
  %v196 = vunpack.c.h.b16 %v23
  %v197 = vunpack.c.l.b16 %v24
  %v198 = vunpack.c.h.b16 %v24
  %v199 = vunpack.c.l.b16 %v25
  %v200 = vunpack.c.h.b16 %v25
  %v201 = vunpack.c.l.b16 %v26
  %v202 = vunpack.c.h.b16 %v26
  %v203 = vunpack.c.l.b16 %v27
  %v204 = vunpack.c.h.b16 %v27
  %v205 = vunpack.c.l.b16 %v28
  %v206 = vunpack.c.h.b16 %v28
  %v207 = vunpack.c.l.b16 %v29
  %v208 = vunpack.c.h.b16 %v29
  %v209 = vunpack.c.l.b16 %v30
  %v210 = vunpack.c.h.b16 %v30
  %v211 = vunpack.c.l.b16 %v31
  %v212 = vunpack.c.h.b16 %v31
  %v213 = vunpack.c.l.b16 %v32
  %v214 = vunpack.c.h.b16 %v32
  %v215 = vunpack.c.l.b16 %v33
  %v216 = vunpack.c.h.b16 %v33
  %v217 = vpack.c.b16 %v193, %v185
  %v218 = vpack.c.b16 %v194, %v186
  %v219 = vpack.c.b16 %v195, %v187
  %v220 = vpack.c.b16 %v196, %v188
  %v221 = vpack.c.b16 %v197, %v189
  %v222 = vpack.c.b16 %v198, %v190
  %v223 = vpack.c.b16 %v199, %v191
  %v224 = vpack.c.b16 %v200, %v192
  %v225 = vpack.c.b16 %v209, %v201
  %v226 = vpack.c.b16 %v210, %v202
  %v227 = vpack.c.b16 %v211, %v203
  %v228 = vpack.c.b16 %v212, %v204
  %v229 = vpack.c.b16 %v213, %v205
  %v230 = vpack.c.b16 %v214, %v206
  %v231 = vpack.c.b16 %v215, %v207
  %v232 = vpack.c.b16 %v216, %v208
  %v377 = vunpack.c.l.b16 %v34
  %v378 = vunpack.c.l.b16 %v35
  %v379 = vunpack.c.l.b16 %v36
  %v380 = vunpack.c.l.b16 %v37
  %v381 = vunpack.c.l.b16 %v38
  %v382 = vunpack.c.l.b16 %v39
  %v383 = vunpack.c.l.b16 %v40
  %v384 = vunpack.c.l.b16 %v41
  %v385 = vunpack.c.l.b16 %v42
  %v386 = vunpack.c.l.b16 %v43
  %v387 = vunpack.c.l.b16 %v44
  %v388 = vunpack.c.l.b16 %v45
  %v389 = vunpack.c.l.b16 %v46
  %v390 = vunpack.c.l.b16 %v47
  %v391 = vunpack.c.l.b16 %v48
  %v392 = vunpack.c.l.b16 %v49
  %v393 = vunpack.c.l.b16 %v50
  %v394 = vunpack.c.l.b16 %v51
  %v395 = vunpack.c.l.b16 %v52
  %v396 = vunpack.c.l.b16 %v53
  %v397 = vunpack.c.l.b16 %v54
  %v398 = vunpack.c.l.b16 %v55
  %v399 = vunpack.c.l.b16 %v56
  %v400 = vunpack.c.l.b16 %v57
  %v401 = vunpack.c.l.b16 %v58
  %v402 = vunpack.c.l.b16 %v59
  %v403 = vunpack.c.l.b16 %v60
  %v404 = vunpack.c.l.b16 %v61
  %v405 = vunpack.c.l.b16 %v62
  %v406 = vunpack.c.l.b16 %v63
  %v407 = vunpack.c.l.b16 %v64
  %v408 = vunpack.c.l.b16 %v65
  %v409 = vunpack.c.l.b16 %v66
  %v410 = vunpack.c.l.b16 %v67
  %v411 = vunpack.c.l.b16 %v68
  %v412 = vunpack.c.l.b16 %v69
  %v413 = vunpack.c.l.b16 %v70
  %v414 = vunpack.c.l.b16 %v71
  %v415 = vunpack.c.l.b16 %v72
  %v416 = vunpack.c.l.b16 %v73
  %v417 = vunpack.c.l.b16 %v74
  %v418 = vunpack.c.l.b16 %v75
  %v419 = vunpack.c.l.b16 %v76
  %v420 = vunpack.c.l.b16 %v77
  %v421 = vunpack.c.l.b16 %v78
  %v422 = vunpack.c.l.b16 %v79
  %v423 = vunpack.c.l.b16 %v80
  %v424 = vunpack.c.l.b16 %v81
  %v425 = vunpack.c.l.b16 %v82
  %v426 = vunpack.c.l.b16 %v83
  %v427 = vunpack.c.l.b16 %v84
  %v428 = vunpack.c.l.b16 %v85
  %v429 = vunpack.c.l.b16 %v86
  %v430 = vunpack.c.l.b16 %v87
  %v431 = vunpack.c.l.b16 %v88
  %v432 = vunpack.c.l.b16 %v89
  %v433 = vunpack.c.l.b16 %v90
  %v434 = vunpack.c.l.b16 %v91
  %v435 = vunpack.c.l.b16 %v92
  %v436 = vunpack.c.l.b16 %v93
  %v437 = vunpack.c.l.b16 %v94
  %v438 = vunpack.c.l.b16 %v95
  %v439 = vunpack.c.l.b16 %v96
  %v440 = vunpack.c.l.b16 %v97
  %v441 = vunpack.c.l.b16 %v98
  %v442 = vunpack.c.l.b16 %v99
  %v443 = vunpack.c.l.b16 %v100
  %v444 = vunpack.c.l.b16 %v101
  %v445 = vunpack.c.l.b16 %v102
  %v446 = vunpack.c.l.b16 %v103
  %v447 = vunpack.c.l.b16 %v104
  %v448 = vunpack.c.l.b16 %v105
  %v449 = vunpack.c.l.b16 %v106
  %v450 = vunpack.c.l.b16 %v107
  %v451 = vunpack.c.l.b16 %v108
  %v452 = vunpack.c.l.b16 %v109
  %v453 = vunpack.c.l.b16 %v110
  %v454 = vunpack.c.l.b16 %v111
  %v455 = vunpack.c.l.b16 %v112
  %v456 = vunpack.c.l.b16 %v113
  %v457 = vunpack.c.l.b16 %v114
  %v458 = vunpack.c.l.b16 %v115
  %v459 = vunpack.c.l.b16 %v116
  %v460 = vunpack.c.l.b16 %v117
  %v461 = vunpack.c.l.b16 %v118
  %v462 = vunpack.c.l.b16 %v119
  %v463 = vunpack.c.l.b16 %v120
  %v464 = vunpack.c.l.b16 %v121
  %v465 = vunpack.c.l.b16 %v122
  %v466 = vunpack.c.l.b16 %v123
  %v467 = vunpack.c.l.b16 %v124
  %v468 = vunpack.c.l.b16 %v125
  %v469 = vunpack.c.l.b16 %v126
  %v470 = vunpack.c.l.b16 %v127
  %v471 = vunpack.c.l.b16 %v128
  %v472 = vunpack.c.l.b16 %v129
  %v473 = vunpack.c.l.b16 %v130
  %v474 = vunpack.c.l.b16 %v131
  %v475 = vunpack.c.l.b16 %v132
  %v476 = vunpack.c.l.b16 %v133
  %v477 = vunpack.c.l.b16 %v134
  %v478 = vunpack.c.l.b16 %v135
  %v479 = vunpack.c.l.b16 %v136
  %v480 = vunpack.c.l.b16 %v137
  %v481 = vunpack.c.l.b16 %v138
  %v482 = vunpack.c.l.b16 %v139
  %v483 = vunpack.c.l.b16 %v140
  %v484 = vunpack.c.l.b16 %v141
  %v485 = vunpack.c.l.b16 %v142
  %v486 = vunpack.c.l.b16 %v143
  %v487 = vunpack.c.l.b16 %v144
  %v488 = vunpack.c.l.b16 %v145
  %v489 = vunpack.c.l.b16 %v146
  %v490 = vunpack.c.l.b16 %v147
  %v491 = vunpack.c.l.b16 %v148
  %v492 = vunpack.c.l.b16 %v149
  %v493 = vunpack.c.l.b16 %v150
  %v494 = vunpack.c.l.b16 %v151
  %v495 = vunpack.c.l.b16 %v152
  %v496 = vunpack.c.l.b16 %v153
  %v497 = vunpack.c.l.b16 %v154
  %v498 = vunpack.c.l.b16 %v155
  %v499 = vunpack.c.l.b16 %v156
  %v500 = vunpack.c.l.b16 %v157
  %v501 = vunpack.c.l.b16 %v158
  %v502 = vunpack.c.l.b16 %v159
  %v503 = vunpack.c.l.b16 %v160
  %v504 = vunpack.c.l.b16 %v161
  %v505 = vpack.c.b16 %v378, %v377
  %v506 = vpack.c.b16 %v380, %v379
  %v507 = vpack.c.b16 %v382, %v381
  %v508 = vpack.c.b16 %v384, %v383
  %v509 = vpack.c.b16 %v386, %v385
  %v510 = vpack.c.b16 %v388, %v387
  %v511 = vpack.c.b16 %v390, %v389
  %v512 = vpack.c.b16 %v392, %v391
  %v513 = vpack.c.b16 %v394, %v393
  %v514 = vpack.c.b16 %v396, %v395
  %v515 = vpack.c.b16 %v398, %v397
  %v516 = vpack.c.b16 %v400, %v399
  %v517 = vpack.c.b16 %v402, %v401
  %v518 = vpack.c.b16 %v404, %v403
  %v519 = vpack.c.b16 %v406, %v405
  %v520 = vpack.c.b16 %v408, %v407
  %v521 = vpack.c.b16 %v410, %v409
  %v522 = vpack.c.b16 %v412, %v411
  %v523 = vpack.c.b16 %v414, %v413
  %v524 = vpack.c.b16 %v416, %v415
  %v525 = vpack.c.b16 %v418, %v417
  %v526 = vpack.c.b16 %v420, %v419
  %v527 = vpack.c.b16 %v422, %v421
  %v528 = vpack.c.b16 %v424, %v423
  %v529 = vpack.c.b16 %v426, %v425
  %v530 = vpack.c.b16 %v428, %v427
  %v531 = vpack.c.b16 %v430, %v429
  %v532 = vpack.c.b16 %v432, %v431
  %v533 = vpack.c.b16 %v434, %v433
  %v534 = vpack.c.b16 %v436, %v435
  %v535 = vpack.c.b16 %v438, %v437
  %v536 = vpack.c.b16 %v440, %v439
  %v537 = vpack.c.b16 %v442, %v441
  %v538 = vpack.c.b16 %v444, %v443
  %v539 = vpack.c.b16 %v446, %v445
  %v540 = vpack.c.b16 %v448, %v447
  %v541 = vpack.c.b16 %v450, %v449
  %v542 = vpack.c.b16 %v452, %v451
  %v543 = vpack.c.b16 %v454, %v453
  %v544 = vpack.c.b16 %v456, %v455
  %v545 = vpack.c.b16 %v458, %v457
  %v546 = vpack.c.b16 %v460, %v459
  %v547 = vpack.c.b16 %v462, %v461
  %v548 = vpack.c.b16 %v464, %v463
  %v549 = vpack.c.b16 %v466, %v465
  %v550 = vpack.c.b16 %v468, %v467
  %v551 = vpack.c.b16 %v470, %v469
  %v552 = vpack.c.b16 %v472, %v471
  %v553 = vpack.c.b16 %v474, %v473
  %v554 = vpack.c.b16 %v476, %v475
  %v555 = vpack.c.b16 %v478, %v477
  %v556 = vpack.c.b16 %v480, %v479
  %v557 = vpack.c.b16 %v482, %v481
  %v558 = vpack.c.b16 %v484, %v483
  %v559 = vpack.c.b16 %v486, %v485
  %v560 = vpack.c.b16 %v488, %v487
  %v561 = vpack.c.b16 %v490, %v489
  %v562 = vpack.c.b16 %v492, %v491
  %v563 = vpack.c.b16 %v494, %v493
  %v564 = vpack.c.b16 %v496, %v495
  %v565 = vpack.c.b16 %v498, %v497
  %v566 = vpack.c.b16 %v500, %v499
  %v567 = vpack.c.b16 %v502, %v501
  %v568 = vpack.c.b16 %v504, %v503
  %633 = vmatprep.subr.bf16.mxu0 0
  %634 = vmatpush1.bf16.msra.mxu0 %v505
  %635 = vmatprep.subr.bf16.mxu0 0
  %636 = vmatpush1.bf16.msra.mxu0 %v506
  %637 = vmatprep.subr.bf16.mxu0 0
  %638 = vmatpush1.bf16.msra.mxu0 %v507
  %639 = vmatprep.subr.bf16.mxu0 0
  %640 = vmatpush1.bf16.msra.mxu0 %v508
  %641 = vmatprep.subr.bf16.mxu0 0
  %642 = vmatpush1.bf16.msra.mxu0 %v509
  %643 = vmatprep.subr.bf16.mxu0 0
  %644 = vmatpush1.bf16.msra.mxu0 %v510
  %645 = vmatprep.subr.bf16.mxu0 0
  %646 = vmatpush1.bf16.msra.mxu0 %v511
  %647 = vmatprep.subr.bf16.mxu0 0
  %648 = vmatpush1.bf16.msra.mxu0 %v512
  %649 = vmatprep.subr.bf16.mxu0 0
  %650 = vmatpush1.bf16.msra.mxu0 %v513
  %651 = vmatprep.subr.bf16.mxu0 0
  %652 = vmatpush1.bf16.msra.mxu0 %v514
  %653 = vmatprep.subr.bf16.mxu0 0
  %654 = vmatpush1.bf16.msra.mxu0 %v515
  %655 = vmatprep.subr.bf16.mxu0 0
  %656 = vmatpush1.bf16.msra.mxu0 %v516
  %657 = vmatprep.subr.bf16.mxu0 0
  %658 = vmatpush1.bf16.msra.mxu0 %v517
  %659 = vmatprep.subr.bf16.mxu0 0
  %660 = vmatpush1.bf16.msra.mxu0 %v518
  %661 = vmatprep.subr.bf16.mxu0 0
  %662 = vmatpush1.bf16.msra.mxu0 %v519
  %663 = vmatprep.subr.bf16.mxu0 0
  %664 = vmatpush1.bf16.msra.mxu0 %v520
  %665 = vmatprep.mubr.bf16.mxu0 %v218
  %666 = vmatmul.mubr.bf16.gmra.mrb[0].mxu0 %v217
  %v667 = vpop.f32.mrb[0].mxu0
  %v668 = vadd.f32 %v167, %v667
  %v669 = vpop.f32.mrb[0].mxu0
  %v670 = vpop.f32.mrb[0].mxu0
  %v671 = vadd.f32 %v167, %v670
  %v672 = vpop.f32.mrb[0].mxu0
  %673 = vmatprep.mubr.bf16.mxu0 %v226
  %674 = vmatmul.mubr.bf16.gmra.mrb[0].mxu0 %v225
  %v675 = vpop.f32.mrb[0].mxu0
  %v676 = vadd.f32 %v167, %v675
  %v677 = vpop.f32.mrb[0].mxu0
  %v678 = vpop.f32.mrb[0].mxu0
  %v679 = vadd.f32 %v167, %v678
  %v680 = vpop.f32.mrb[0].mxu0
  %681 = vdwg.mxu0
  %682 = vmatprep.subr.bf16.mxu0 0
  %683 = vmatpush1.bf16.msra.mxu0 %v521
  %684 = vmatprep.subr.bf16.mxu0 0
  %685 = vmatpush1.bf16.msra.mxu0 %v522
  %686 = vmatprep.subr.bf16.mxu0 0
  %687 = vmatpush1.bf16.msra.mxu0 %v523
  %688 = vmatprep.subr.bf16.mxu0 0
  %689 = vmatpush1.bf16.msra.mxu0 %v524
  %690 = vmatprep.subr.bf16.mxu0 0
  %691 = vmatpush1.bf16.msra.mxu0 %v525
  %692 = vmatprep.subr.bf16.mxu0 0
  %693 = vmatpush1.bf16.msra.mxu0 %v526
  %694 = vmatprep.subr.bf16.mxu0 0
  %695 = vmatpush1.bf16.msra.mxu0 %v527
  %696 = vmatprep.subr.bf16.mxu0 0
  %697 = vmatpush1.bf16.msra.mxu0 %v528
  %698 = vmatprep.subr.bf16.mxu0 0
  %699 = vmatpush1.bf16.msra.mxu0 %v529
  %700 = vmatprep.subr.bf16.mxu0 0
  %701 = vmatpush1.bf16.msra.mxu0 %v530
  %702 = vmatprep.subr.bf16.mxu0 0
  %703 = vmatpush1.bf16.msra.mxu0 %v531
  %704 = vmatprep.subr.bf16.mxu0 0
  %705 = vmatpush1.bf16.msra.mxu0 %v532
  %706 = vmatprep.subr.bf16.mxu0 0
  %707 = vmatpush1.bf16.msra.mxu0 %v533
  %708 = vmatprep.subr.bf16.mxu0 0
  %709 = vmatpush1.bf16.msra.mxu0 %v534
  %710 = vmatprep.subr.bf16.mxu0 0
  %711 = vmatpush1.bf16.msra.mxu0 %v535
  %712 = vmatprep.subr.bf16.mxu0 0
  %713 = vmatpush1.bf16.msra.mxu0 %v536
  %714 = vmatprep.mubr.bf16.mxu0 %v220
  %715 = vmatmul.mubr.bf16.gmra.mrb[0].mxu0 %v219
  %v716 = vpop.f32.mrb[0].mxu0
  %v717 = vadd.f32 %v668, %v716
  %v718 = vpop.f32.mrb[0].mxu0
  %v719 = vpop.f32.mrb[0].mxu0
  %v720 = vadd.f32 %v671, %v719
  %v721 = vpop.f32.mrb[0].mxu0
  %722 = vmatprep.mubr.bf16.mxu0 %v228
  %723 = vmatmul.mubr.bf16.gmra.mrb[0].mxu0 %v227
  %v724 = vpop.f32.mrb[0].mxu0
  %v725 = vadd.f32 %v676, %v724
  %v726 = vpop.f32.mrb[0].mxu0
  %v727 = vpop.f32.mrb[0].mxu0
  %v728 = vadd.f32 %v679, %v727
  %v729 = vpop.f32.mrb[0].mxu0
  %730 = vdwg.mxu0
  %731 = vmatprep.subr.bf16.mxu0 0
  %732 = vmatpush1.bf16.msra.mxu0 %v537
  %733 = vmatprep.subr.bf16.mxu0 0
  %734 = vmatpush1.bf16.msra.mxu0 %v538
  %735 = vmatprep.subr.bf16.mxu0 0
  %736 = vmatpush1.bf16.msra.mxu0 %v539
  %737 = vmatprep.subr.bf16.mxu0 0
  %738 = vmatpush1.bf16.msra.mxu0 %v540
  %739 = vmatprep.subr.bf16.mxu0 0
  %740 = vmatpush1.bf16.msra.mxu0 %v541
  %741 = vmatprep.subr.bf16.mxu0 0
  %742 = vmatpush1.bf16.msra.mxu0 %v542
  %743 = vmatprep.subr.bf16.mxu0 0
  %744 = vmatpush1.bf16.msra.mxu0 %v543
  %745 = vmatprep.subr.bf16.mxu0 0
  %746 = vmatpush1.bf16.msra.mxu0 %v544
  %747 = vmatprep.subr.bf16.mxu0 0
  %748 = vmatpush1.bf16.msra.mxu0 %v545
  %749 = vmatprep.subr.bf16.mxu0 0
  %750 = vmatpush1.bf16.msra.mxu0 %v546
  %751 = vmatprep.subr.bf16.mxu0 0
  %752 = vmatpush1.bf16.msra.mxu0 %v547
  %753 = vmatprep.subr.bf16.mxu0 0
  %754 = vmatpush1.bf16.msra.mxu0 %v548
  %755 = vmatprep.subr.bf16.mxu0 0
  %756 = vmatpush1.bf16.msra.mxu0 %v549
  %757 = vmatprep.subr.bf16.mxu0 0
  %758 = vmatpush1.bf16.msra.mxu0 %v550
  %759 = vmatprep.subr.bf16.mxu0 0
  %760 = vmatpush1.bf16.msra.mxu0 %v551
  %761 = vmatprep.subr.bf16.mxu0 0
  %762 = vmatpush1.bf16.msra.mxu0 %v552
  %763 = vmatprep.mubr.bf16.mxu0 %v222
  %764 = vmatmul.mubr.bf16.gmra.mrb[0].mxu0 %v221
  %v765 = vpop.f32.mrb[0].mxu0
  %v766 = vadd.f32 %v717, %v765
  %v767 = vpop.f32.mrb[0].mxu0
  %v768 = vpop.f32.mrb[0].mxu0
  %v769 = vadd.f32 %v720, %v768
  %v770 = vpop.f32.mrb[0].mxu0
  %771 = vmatprep.mubr.bf16.mxu0 %v230
  %772 = vmatmul.mubr.bf16.gmra.mrb[0].mxu0 %v229
  %v773 = vpop.f32.mrb[0].mxu0
  %v774 = vadd.f32 %v725, %v773
  %v775 = vpop.f32.mrb[0].mxu0
  %v776 = vpop.f32.mrb[0].mxu0
  %v777 = vadd.f32 %v728, %v776
  %v778 = vpop.f32.mrb[0].mxu0
  %779 = vdwg.mxu0
  %780 = vmatprep.subr.bf16.mxu0 0
  %781 = vmatpush1.bf16.msra.mxu0 %v553
  %782 = vmatprep.subr.bf16.mxu0 0
  %783 = vmatpush1.bf16.msra.mxu0 %v554
  %784 = vmatprep.subr.bf16.mxu0 0
  %785 = vmatpush1.bf16.msra.mxu0 %v555
  %786 = vmatprep.subr.bf16.mxu0 0
  %787 = vmatpush1.bf16.msra.mxu0 %v556
  %788 = vmatprep.subr.bf16.mxu0 0
  %789 = vmatpush1.bf16.msra.mxu0 %v557
  %790 = vmatprep.subr.bf16.mxu0 0
  %791 = vmatpush1.bf16.msra.mxu0 %v558
  %792 = vmatprep.subr.bf16.mxu0 0
  %793 = vmatpush1.bf16.msra.mxu0 %v559
  %794 = vmatprep.subr.bf16.mxu0 0
  %795 = vmatpush1.bf16.msra.mxu0 %v560
  %796 = vmatprep.subr.bf16.mxu0 0
  %797 = vmatpush1.bf16.msra.mxu0 %v561
  %798 = vmatprep.subr.bf16.mxu0 0
  %799 = vmatpush1.bf16.msra.mxu0 %v562
  %800 = vmatprep.subr.bf16.mxu0 0
  %801 = vmatpush1.bf16.msra.mxu0 %v563
  %802 = vmatprep.subr.bf16.mxu0 0
  %803 = vmatpush1.bf16.msra.mxu0 %v564
  %804 = vmatprep.subr.bf16.mxu0 0
  %805 = vmatpush1.bf16.msra.mxu0 %v565
  %806 = vmatprep.subr.bf16.mxu0 0
  %807 = vmatpush1.bf16.msra.mxu0 %v566
  %808 = vmatprep.subr.bf16.mxu0 0
  %809 = vmatpush1.bf16.msra.mxu0 %v567
  %810 = vmatprep.subr.bf16.mxu0 0
  %811 = vmatpush1.bf16.msra.mxu0 %v568
  %812 = vmatprep.mubr.bf16.mxu0 %v224
  %813 = vmatmul.mubr.bf16.gmra.mrb[0].mxu0 %v223
  %v814 = vpop.f32.mrb[0].mxu0
  %v815 = vadd.f32 %v766, %v814
  %v816 = vpop.f32.mrb[0].mxu0
  %v817 = vpop.f32.mrb[0].mxu0
  %v818 = vadd.f32 %v769, %v817
  %v819 = vpop.f32.mrb[0].mxu0
  %820 = vmatprep.mubr.bf16.mxu0 %v232
  %821 = vmatmul.mubr.bf16.gmra.mrb[0].mxu0 %v231
  %v822 = vpop.f32.mrb[0].mxu0
  %v823 = vadd.f32 %v774, %v822
  %v824 = vpop.f32.mrb[0].mxu0
  %v825 = vpop.f32.mrb[0].mxu0
  %v826 = vadd.f32 %v777, %v825
  %v827 = vpop.f32.mrb[0].mxu0
  %828 = vdwg.mxu0
  %v829 = vadd.f32 %v815, %v818
  %v830 = vadd.f32 %v829, %v823
  %v831 = vadd.f32 %v830, %v826
  %v832 = vrot.slane %v831, 4
  %v833 = vadd.f32 %v831, %v832
  %v834 = vrot.slane %v833, 2
  %v835 = vadd.f32 %v833, %v834
  %v836 = vrot.slane %v835, 1
  %v837 = vadd.f32 %v835, %v836
  %v838 = vmul.f32 %v815, %v815
  %v839 = vmul.f32 %v818, %v818
  %v840 = vmul.f32 %v823, %v823
  %v841 = vmul.f32 %v826, %v826
  %v842 = vadd.f32 %v838, %v839
  %v843 = vadd.f32 %v842, %v840
  %v844 = vadd.f32 %v843, %v841
  %v845 = vrot.slane %v844, 4
  %v846 = vadd.f32 %v844, %v845
  %v847 = vrot.slane %v846, 2
  %v848 = vadd.f32 %v846, %v847
  %v849 = vrot.slane %v848, 1
  %v850 = vadd.f32 %v848, %v849
  %851 = vst [vmem:[%s4] sm:$0xff] %v837
  %852 = vst [vmem:[%s5] sm:$0xff] %v850
  %v853 = vpack.c.bf16 %v818, %v815
  %v854 = vpack.c.bf16 %v826, %v823
  %v857 = vunpack.c.l.b16 %v853
  %v858 = vunpack.c.h.b16 %v853
  %v859 = vunpack.c.l.b16 %v854
  %v860 = vunpack.c.h.b16 %v854
  %v861 = vpack.c.b16 %v857, %v857
  %v862 = vpack.c.b16 %v858, %v858
  %v863 = vpack.c.b16 %v859, %v859
  %v864 = vpack.c.b16 %v860, %v860
  %869 = vst [vmem:[%s3] sm:$0xf] %v861
  %870 = vst [vmem:[%s3 + $0x4] sm:$0xf] %v862
  %871 = vst [vmem:[%s3 + $0x8] sm:$0xf] %v863
  %872 = vst [vmem:[%s3 + $0xc] sm:$0xf] %v864
  // Predicated region
  $region14: #{generator_forward.13} parent=0 // pred_check
    _
  $region15: #{generator_forward.13} parent=0 // pred_check_branch
    %874 = sbr.rel (0) target = $region17
  $region16: #{generator_forward.13} parent=0 // pred_region
    _
  $region17: #{generator_forward.13} parent=0 // pred_fallthru
    _
  // Predicated region
  $region18: #{generator_forward.13} parent=0 // pred_check
    _
  $region19: #{generator_forward.13} parent=0 // pred_check_branch
    %876 = sbr.rel (0) target = $region21
  $region20: #{generator_forward.13} parent=0 // pred_region
    _
  $region21: #{generator_forward.13} parent=0 // pred_fallthru
    _
  // Predicated region
  $region22: #{generator_forward.13} parent=0 // pred_check
    _
  $region23: #{generator_forward.13} parent=0 // pred_check_branch
    %878 = sbr.rel (0) target = $region25
  $region24: #{generator_forward.13} parent=0 // pred_region
    _
  $region25: #{generator_forward.13} parent=0 // pred_fallthru
    _
  // Predicated region
  $region26: #{generator_forward.13} parent=0 // pred_check
    _
  $region27: #{generator_forward.13} parent=0 // pred_check_branch
    %880 = sbr.rel (0) target = $region29
  $region28: #{generator_forward.13} parent=0 // pred_region
    _
  $region29: #{generator_forward.13} parent=0 // pred_fallthru
    _
  // Predicated region
  $region30: #{generator_forward.13} parent=0 // pred_check
    _
  $region31: #{generator_forward.13} parent=0 // pred_check_branch
    %882 = sbr.rel (0) target = $region33
  $region32: #{generator_forward.13} parent=0 // pred_region
    _
  $region33: #{generator_forward.13} parent=0 // pred_fallthru
    _
  // Predicated region
  $region34: #{generator_forward.13} parent=0 // pred_check
    _
  $region35: #{generator_forward.13} parent=0 // pred_check_branch
    %884 = sbr.rel (0) target = $region37
  $region36: #{generator_forward.13} parent=0 // pred_region
    _
  $region37: #{generator_forward.13} parent=0 // pred_fallthru
    _

// kernel: generator_forward.15
$region0: #{generator_forward.15}
  #allocation0 [shape = 'u32[]', space=smem, size = 0x4, offset = 0x4, fixed_abs, tag = 'smem constant byte address 0x4 - core index']
  #allocation1 [shape = 'u32[144,128]{1,0:T(1,128)}', space=vmem, size = 0x12000, scoped, tag = 'internal scratch']
  %s0 = inlined_call_operand.vmem [shape: bf16[32,512], index: 0, kind: input, shape index: {}]
  %s1 = inlined_call_operand.vmem [shape: bf16[512,64], index: 1, kind: input, shape index: {}]
  %s2 = inlined_call_operand.vmem [shape: f32[1,64], index: 2, kind: input, shape index: {}]
  %s3 = inlined_call_operand.vmem [shape: bf16[32,64], index: 3, kind: output, shape index: {0}]
  %s4 = inlined_call_operand.vmem [shape: f32[8,64], index: 4, kind: output, shape index: {1}]
  %s5 = inlined_call_operand.vmem [shape: f32[8,64], index: 5, kind: output, shape index: {2}]
  %6 = xla_tuple %s3, %s4, %s5
  %s7 = sld [smem:[#allocation0]]
  $region38: #{generator_forward.15} parent=0
    _
  %s9 = ssub.s32 1, %s7
  %s10 = scalar_select 0, %s9, %s7
  // Predicated region
  $region2: #{generator_forward.15} parent=0 // pred_check
    _
  $region3: #{generator_forward.15} parent=0 // pred_check_branch
    %12 = sbr.rel (0) target = $region5
  $region4: #{generator_forward.15} parent=0 // pred_region
    _
  $region5: #{generator_forward.15} parent=0 // pred_fallthru
    _
  // Predicated region
  $region6: #{generator_forward.15} parent=0 // pred_check
    _
  $region7: #{generator_forward.15} parent=0 // pred_check_branch
    %14 = sbr.rel (0) target = $region9
  $region8: #{generator_forward.15} parent=0 // pred_region
    _
  $region9: #{generator_forward.15} parent=0 // pred_fallthru
    _
  // Predicated region
  $region10: #{generator_forward.15} parent=0 // pred_check
    _
  $region11: #{generator_forward.15} parent=0 // pred_check_branch
    %16 = sbr.rel (0) target = $region13
  $region12: #{generator_forward.15} parent=0 // pred_region
    _
  $region13: #{generator_forward.15} parent=0 // pred_fallthru
    _
  %v18 = vld [vmem:[%s0] sm:$0xff]
  %v19 = vld [vmem:[%s0 + $0x8] sm:$0xff]
  %v20 = vld [vmem:[%s0 + $0x10] sm:$0xff]
  %v21 = vld [vmem:[%s0 + $0x18] sm:$0xff]
  %v22 = vld [vmem:[%s0 + $0x20] sm:$0xff]
  %v23 = vld [vmem:[%s0 + $0x28] sm:$0xff]
  %v24 = vld [vmem:[%s0 + $0x30] sm:$0xff]
  %v25 = vld [vmem:[%s0 + $0x38] sm:$0xff]
  %v26 = vld [vmem:[%s1] sm:$0xf]
  %v27 = vld [vmem:[%s1 + $0x4] sm:$0xf]
  %v28 = vld [vmem:[%s1 + $0x8] sm:$0xf]
  %v29 = vld [vmem:[%s1 + $0xc] sm:$0xf]
  %v30 = vld [vmem:[%s1 + $0x10] sm:$0xf]
  %v31 = vld [vmem:[%s1 + $0x14] sm:$0xf]
  %v32 = vld [vmem:[%s1 + $0x18] sm:$0xf]
  %v33 = vld [vmem:[%s1 + $0x1c] sm:$0xf]
  %v34 = vld [vmem:[%s1 + $0x20] sm:$0xf]
  %v35 = vld [vmem:[%s1 + $0x24] sm:$0xf]
  %v36 = vld [vmem:[%s1 + $0x28] sm:$0xf]
  %v37 = vld [vmem:[%s1 + $0x2c] sm:$0xf]
  %v38 = vld [vmem:[%s1 + $0x30] sm:$0xf]
  %v39 = vld [vmem:[%s1 + $0x34] sm:$0xf]
  %v40 = vld [vmem:[%s1 + $0x38] sm:$0xf]
  %v41 = vld [vmem:[%s1 + $0x3c] sm:$0xf]
  %v42 = vld [vmem:[%s1 + $0x40] sm:$0xf]
  %v43 = vld [vmem:[%s1 + $0x44] sm:$0xf]
  %v44 = vld [vmem:[%s1 + $0x48] sm:$0xf]
  %v45 = vld [vmem:[%s1 + $0x4c] sm:$0xf]
  %v46 = vld [vmem:[%s1 + $0x50] sm:$0xf]
  %v47 = vld [vmem:[%s1 + $0x54] sm:$0xf]
  %v48 = vld [vmem:[%s1 + $0x58] sm:$0xf]
  %v49 = vld [vmem:[%s1 + $0x5c] sm:$0xf]
  %v50 = vld [vmem:[%s1 + $0x60] sm:$0xf]
  %v51 = vld [vmem:[%s1 + $0x64] sm:$0xf]
  %v52 = vld [vmem:[%s1 + $0x68] sm:$0xf]
  %v53 = vld [vmem:[%s1 + $0x6c] sm:$0xf]
  %v54 = vld [vmem:[%s1 + $0x70] sm:$0xf]
  %v55 = vld [vmem:[%s1 + $0x74] sm:$0xf]
  %v56 = vld [vmem:[%s1 + $0x78] sm:$0xf]
  %v57 = vld [vmem:[%s1 + $0x7c] sm:$0xf]
  %v58 = vld [vmem:[%s1 + $0x80] sm:$0xf]
  %v59 = vld [vmem:[%s1 + $0x84] sm:$0xf]
  %v60 = vld [vmem:[%s1 + $0x88] sm:$0xf]
  %v61 = vld [vmem:[%s1 + $0x8c] sm:$0xf]
  %v62 = vld [vmem:[%s1 + $0x90] sm:$0xf]
  %v63 = vld [vmem:[%s1 + $0x94] sm:$0xf]
  %v64 = vld [vmem:[%s1 + $0x98] sm:$0xf]
  %v65 = vld [vmem:[%s1 + $0x9c] sm:$0xf]
  %v66 = vld [vmem:[%s1 + $0xa0] sm:$0xf]
  %v67 = vld [vmem:[%s1 + $0xa4] sm:$0xf]
  %v68 = vld [vmem:[%s1 + $0xa8] sm:$0xf]
  %v69 = vld [vmem:[%s1 + $0xac] sm:$0xf]
  %v70 = vld [vmem:[%s1 + $0xb0] sm:$0xf]
  %v71 = vld [vmem:[%s1 + $0xb4] sm:$0xf]
  %v72 = vld [vmem:[%s1 + $0xb8] sm:$0xf]
  %v73 = vld [vmem:[%s1 + $0xbc] sm:$0xf]
  %v74 = vld [vmem:[%s1 + $0xc0] sm:$0xf]
  %v75 = vld [vmem:[%s1 + $0xc4] sm:$0xf]
  %v76 = vld [vmem:[%s1 + $0xc8] sm:$0xf]
  %v77 = vld [vmem:[%s1 + $0xcc] sm:$0xf]
  %v78 = vld [vmem:[%s1 + $0xd0] sm:$0xf]
  %v79 = vld [vmem:[%s1 + $0xd4] sm:$0xf]
  %v80 = vld [vmem:[%s1 + $0xd8] sm:$0xf]
  %v81 = vld [vmem:[%s1 + $0xdc] sm:$0xf]
  %v82 = vld [vmem:[%s1 + $0xe0] sm:$0xf]
  %v83 = vld [vmem:[%s1 + $0xe4] sm:$0xf]
  %v84 = vld [vmem:[%s1 + $0xe8] sm:$0xf]
  %v85 = vld [vmem:[%s1 + $0xec] sm:$0xf]
  %v86 = vld [vmem:[%s1 + $0xf0] sm:$0xf]
  %v87 = vld [vmem:[%s1 + $0xf4] sm:$0xf]
  %v88 = vld [vmem:[%s1 + $0xf8] sm:$0xf]
  %v89 = vld [vmem:[%s1 + $0xfc] sm:$0xf]
  %v90 = vld [vmem:[%s2] sm:$0x1]
  %v92 = vlaneseq
  %v93 = vshrl.u32 %v92, 7
  %v94 = vsub.s32 0, %v93
  %v95 = vrot.slane %v90, %v94
  %v105 = vunpack.c.l.b16 %v18
  %v106 = vunpack.c.h.b16 %v18
  %v107 = vunpack.c.l.b16 %v19
  %v108 = vunpack.c.h.b16 %v19
  %v109 = vunpack.c.l.b16 %v20
  %v110 = vunpack.c.h.b16 %v20
  %v111 = vunpack.c.l.b16 %v21
  %v112 = vunpack.c.h.b16 %v21
  %v113 = vunpack.c.l.b16 %v22
  %v114 = vunpack.c.h.b16 %v22
  %v115 = vunpack.c.l.b16 %v23
  %v116 = vunpack.c.h.b16 %v23
  %v117 = vunpack.c.l.b16 %v24
  %v118 = vunpack.c.h.b16 %v24
  %v119 = vunpack.c.l.b16 %v25
  %v120 = vunpack.c.h.b16 %v25
  %v121 = vpack.c.b16 %v109, %v105
  %v122 = vpack.c.b16 %v110, %v106
  %v123 = vpack.c.b16 %v111, %v107
  %v124 = vpack.c.b16 %v112, %v108
  %v125 = vpack.c.b16 %v117, %v113
  %v126 = vpack.c.b16 %v118, %v114
  %v127 = vpack.c.b16 %v119, %v115
  %v128 = vpack.c.b16 %v120, %v116
  %v201 = vunpack.c.l.b16 %v26
  %v202 = vunpack.c.l.b16 %v27
  %v203 = vunpack.c.l.b16 %v28
  %v204 = vunpack.c.l.b16 %v29
  %v205 = vunpack.c.l.b16 %v30
  %v206 = vunpack.c.l.b16 %v31
  %v207 = vunpack.c.l.b16 %v32
  %v208 = vunpack.c.l.b16 %v33
  %v209 = vunpack.c.l.b16 %v34
  %v210 = vunpack.c.l.b16 %v35
  %v211 = vunpack.c.l.b16 %v36
  %v212 = vunpack.c.l.b16 %v37
  %v213 = vunpack.c.l.b16 %v38
  %v214 = vunpack.c.l.b16 %v39
  %v215 = vunpack.c.l.b16 %v40
  %v216 = vunpack.c.l.b16 %v41
  %v217 = vunpack.c.l.b16 %v42
  %v218 = vunpack.c.l.b16 %v43
  %v219 = vunpack.c.l.b16 %v44
  %v220 = vunpack.c.l.b16 %v45
  %v221 = vunpack.c.l.b16 %v46
  %v222 = vunpack.c.l.b16 %v47
  %v223 = vunpack.c.l.b16 %v48
  %v224 = vunpack.c.l.b16 %v49
  %v225 = vunpack.c.l.b16 %v50
  %v226 = vunpack.c.l.b16 %v51
  %v227 = vunpack.c.l.b16 %v52
  %v228 = vunpack.c.l.b16 %v53
  %v229 = vunpack.c.l.b16 %v54
  %v230 = vunpack.c.l.b16 %v55
  %v231 = vunpack.c.l.b16 %v56
  %v232 = vunpack.c.l.b16 %v57
  %v233 = vunpack.c.l.b16 %v58
  %v234 = vunpack.c.l.b16 %v59
  %v235 = vunpack.c.l.b16 %v60
  %v236 = vunpack.c.l.b16 %v61
  %v237 = vunpack.c.l.b16 %v62
  %v238 = vunpack.c.l.b16 %v63
  %v239 = vunpack.c.l.b16 %v64
  %v240 = vunpack.c.l.b16 %v65
  %v241 = vunpack.c.l.b16 %v66
  %v242 = vunpack.c.l.b16 %v67
  %v243 = vunpack.c.l.b16 %v68
  %v244 = vunpack.c.l.b16 %v69
  %v245 = vunpack.c.l.b16 %v70
  %v246 = vunpack.c.l.b16 %v71
  %v247 = vunpack.c.l.b16 %v72
  %v248 = vunpack.c.l.b16 %v73
  %v249 = vunpack.c.l.b16 %v74
  %v250 = vunpack.c.l.b16 %v75
  %v251 = vunpack.c.l.b16 %v76
  %v252 = vunpack.c.l.b16 %v77
  %v253 = vunpack.c.l.b16 %v78
  %v254 = vunpack.c.l.b16 %v79
  %v255 = vunpack.c.l.b16 %v80
  %v256 = vunpack.c.l.b16 %v81
  %v257 = vunpack.c.l.b16 %v82
  %v258 = vunpack.c.l.b16 %v83
  %v259 = vunpack.c.l.b16 %v84
  %v260 = vunpack.c.l.b16 %v85
  %v261 = vunpack.c.l.b16 %v86
  %v262 = vunpack.c.l.b16 %v87
  %v263 = vunpack.c.l.b16 %v88
  %v264 = vunpack.c.l.b16 %v89
  %v265 = vpack.c.b16 %v202, %v201
  %v266 = vpack.c.b16 %v204, %v203
  %v267 = vpack.c.b16 %v206, %v205
  %v268 = vpack.c.b16 %v208, %v207
  %v269 = vpack.c.b16 %v210, %v209
  %v270 = vpack.c.b16 %v212, %v211
  %v271 = vpack.c.b16 %v214, %v213
  %v272 = vpack.c.b16 %v216, %v215
  %v273 = vpack.c.b16 %v218, %v217
  %v274 = vpack.c.b16 %v220, %v219
  %v275 = vpack.c.b16 %v222, %v221
  %v276 = vpack.c.b16 %v224, %v223
  %v277 = vpack.c.b16 %v226, %v225
  %v278 = vpack.c.b16 %v228, %v227
  %v279 = vpack.c.b16 %v230, %v229
  %v280 = vpack.c.b16 %v232, %v231
  %v281 = vpack.c.b16 %v234, %v233
  %v282 = vpack.c.b16 %v236, %v235
  %v283 = vpack.c.b16 %v238, %v237
  %v284 = vpack.c.b16 %v240, %v239
  %v285 = vpack.c.b16 %v242, %v241
  %v286 = vpack.c.b16 %v244, %v243
  %v287 = vpack.c.b16 %v246, %v245
  %v288 = vpack.c.b16 %v248, %v247
  %v289 = vpack.c.b16 %v250, %v249
  %v290 = vpack.c.b16 %v252, %v251
  %v291 = vpack.c.b16 %v254, %v253
  %v292 = vpack.c.b16 %v256, %v255
  %v293 = vpack.c.b16 %v258, %v257
  %v294 = vpack.c.b16 %v260, %v259
  %v295 = vpack.c.b16 %v262, %v261
  %v296 = vpack.c.b16 %v264, %v263
  %329 = vmatprep.subr.bf16.mxu0 0
  %330 = vmatpush1.bf16.msra.mxu0 %v265
  %331 = vmatprep.subr.bf16.mxu0 0
  %332 = vmatpush1.bf16.msra.mxu0 %v266
  %333 = vmatprep.subr.bf16.mxu0 0
  %334 = vmatpush1.bf16.msra.mxu0 %v267
  %335 = vmatprep.subr.bf16.mxu0 0
  %336 = vmatpush1.bf16.msra.mxu0 %v268
  %337 = vmatprep.subr.bf16.mxu0 0
  %338 = vmatpush1.bf16.msra.mxu0 %v269
  %339 = vmatprep.subr.bf16.mxu0 0
  %340 = vmatpush1.bf16.msra.mxu0 %v270
  %341 = vmatprep.subr.bf16.mxu0 0
  %342 = vmatpush1.bf16.msra.mxu0 %v271
  %343 = vmatprep.subr.bf16.mxu0 0
  %344 = vmatpush1.bf16.msra.mxu0 %v272
  %345 = vmatprep.subr.bf16.mxu0 0
  %346 = vmatpush1.bf16.msra.mxu0 %v273
  %347 = vmatprep.subr.bf16.mxu0 0
  %348 = vmatpush1.bf16.msra.mxu0 %v274
  %349 = vmatprep.subr.bf16.mxu0 0
  %350 = vmatpush1.bf16.msra.mxu0 %v275
  %351 = vmatprep.subr.bf16.mxu0 0
  %352 = vmatpush1.bf16.msra.mxu0 %v276
  %353 = vmatprep.subr.bf16.mxu0 0
  %354 = vmatpush1.bf16.msra.mxu0 %v277
  %355 = vmatprep.subr.bf16.mxu0 0
  %356 = vmatpush1.bf16.msra.mxu0 %v278
  %357 = vmatprep.subr.bf16.mxu0 0
  %358 = vmatpush1.bf16.msra.mxu0 %v279
  %359 = vmatprep.subr.bf16.mxu0 0
  %360 = vmatpush1.bf16.msra.mxu0 %v280
  %361 = vmatprep.mubr.bf16.mxu0 %v122
  %362 = vmatmul.mubr.bf16.gmra.mrb[0].mxu0 %v121
  %v363 = vpop.f32.mrb[0].mxu0
  %v364 = vadd.f32 %v95, %v363
  %v365 = vpop.f32.mrb[0].mxu0
  %v366 = vpop.f32.mrb[0].mxu0
  %v367 = vadd.f32 %v95, %v366
  %v368 = vpop.f32.mrb[0].mxu0
  %369 = vmatprep.mubr.bf16.mxu0 %v126
  %370 = vmatmul.mubr.bf16.gmra.mrb[0].mxu0 %v125
  %v371 = vpop.f32.mrb[0].mxu0
  %v372 = vadd.f32 %v95, %v371
  %v373 = vpop.f32.mrb[0].mxu0
  %v374 = vpop.f32.mrb[0].mxu0
  %v375 = vadd.f32 %v95, %v374
  %v376 = vpop.f32.mrb[0].mxu0
  %377 = vdwg.mxu0
  %378 = vmatprep.subr.bf16.mxu0 0
  %379 = vmatpush1.bf16.msra.mxu0 %v281
  %380 = vmatprep.subr.bf16.mxu0 0
  %381 = vmatpush1.bf16.msra.mxu0 %v282
  %382 = vmatprep.subr.bf16.mxu0 0
  %383 = vmatpush1.bf16.msra.mxu0 %v283
  %384 = vmatprep.subr.bf16.mxu0 0
  %385 = vmatpush1.bf16.msra.mxu0 %v284
  %386 = vmatprep.subr.bf16.mxu0 0
  %387 = vmatpush1.bf16.msra.mxu0 %v285
  %388 = vmatprep.subr.bf16.mxu0 0
  %389 = vmatpush1.bf16.msra.mxu0 %v286
  %390 = vmatprep.subr.bf16.mxu0 0
  %391 = vmatpush1.bf16.msra.mxu0 %v287
  %392 = vmatprep.subr.bf16.mxu0 0
  %393 = vmatpush1.bf16.msra.mxu0 %v288
  %394 = vmatprep.subr.bf16.mxu0 0
  %395 = vmatpush1.bf16.msra.mxu0 %v289
  %396 = vmatprep.subr.bf16.mxu0 0
  %397 = vmatpush1.bf16.msra.mxu0 %v290
  %398 = vmatprep.subr.bf16.mxu0 0
  %399 = vmatpush1.bf16.msra.mxu0 %v291
  %400 = vmatprep.subr.bf16.mxu0 0
  %401 = vmatpush1.bf16.msra.mxu0 %v292
  %402 = vmatprep.subr.bf16.mxu0 0
  %403 = vmatpush1.bf16.msra.mxu0 %v293
  %404 = vmatprep.subr.bf16.mxu0 0
  %405 = vmatpush1.bf16.msra.mxu0 %v294
  %406 = vmatprep.subr.bf16.mxu0 0
  %407 = vmatpush1.bf16.msra.mxu0 %v295
  %408 = vmatprep.subr.bf16.mxu0 0
  %409 = vmatpush1.bf16.msra.mxu0 %v296
  %410 = vmatprep.mubr.bf16.mxu0 %v124
  %411 = vmatmul.mubr.bf16.gmra.mrb[0].mxu0 %v123
  %v412 = vpop.f32.mrb[0].mxu0
  %v413 = vadd.f32 %v364, %v412
  %v414 = vpop.f32.mrb[0].mxu0
  %v415 = vpop.f32.mrb[0].mxu0
  %v416 = vadd.f32 %v367, %v415
  %v417 = vpop.f32.mrb[0].mxu0
  %418 = vmatprep.mubr.bf16.mxu0 %v128
  %419 = vmatmul.mubr.bf16.gmra.mrb[0].mxu0 %v127
  %v420 = vpop.f32.mrb[0].mxu0
  %v421 = vadd.f32 %v372, %v420
  %v422 = vpop.f32.mrb[0].mxu0
  %v423 = vpop.f32.mrb[0].mxu0
  %v424 = vadd.f32 %v375, %v423
  %v425 = vpop.f32.mrb[0].mxu0
  %426 = vdwg.mxu0
  %vm427 = vcmask 523264
  %v428 = vsel %vm427, %v413, 0.0
  %v429 = vsel %vm427, %v416, 0.0
  %v430 = vadd.f32 %v428, %v429
  %v431 = vsel %vm427, %v421, 0.0
  %v432 = vadd.f32 %v430, %v431
  %v433 = vsel %vm427, %v424, 0.0
  %v434 = vadd.f32 %v432, %v433
  %v435 = vrot.slane %v434, 4
  %v436 = vadd.f32 %v434, %v435
  %v437 = vrot.slane %v436, 2
  %v438 = vadd.f32 %v436, %v437
  %v439 = vrot.slane %v438, 1
  %v440 = vadd.f32 %v438, %v439
  %v441 = vmul.f32 %v413, %v413
  %v442 = vmul.f32 %v416, %v416
  %v443 = vmul.f32 %v421, %v421
  %v444 = vmul.f32 %v424, %v424
  %v445 = vsel %vm427, %v441, 0.0
  %v446 = vsel %vm427, %v442, 0.0
  %v447 = vadd.f32 %v445, %v446
  %v448 = vsel %vm427, %v443, 0.0
  %v449 = vadd.f32 %v447, %v448
  %v450 = vsel %vm427, %v444, 0.0
  %v451 = vadd.f32 %v449, %v450
  %v452 = vrot.slane %v451, 4
  %v453 = vadd.f32 %v451, %v452
  %v454 = vrot.slane %v453, 2
  %v455 = vadd.f32 %v453, %v454
  %v456 = vrot.slane %v455, 1
  %v457 = vadd.f32 %v455, %v456
  %458 = vst.msk [vmem:[%s4] sm:$0xff] %vm427, %v440
  %459 = vst.msk [vmem:[%s5] sm:$0xff] %vm427, %v457
  %v460 = vpack.c.bf16 %v416, %v413
  %v461 = vpack.c.bf16 %v424, %v421
  %v464 = vunpack.c.l.b16 %v460
  %v465 = vunpack.c.h.b16 %v460
  %v466 = vunpack.c.l.b16 %v461
  %v467 = vunpack.c.h.b16 %v461
  %v468 = vpack.c.b16 %v464, %v464
  %v469 = vpack.c.b16 %v465, %v465
  %v470 = vpack.c.b16 %v466, %v466
  %v471 = vpack.c.b16 %v467, %v467
  %vm476 = vcmask 519168
  %477 = vst.msk [vmem:[%s3] sm:$0xf] %vm476, %v468
  %478 = vst.msk [vmem:[%s3 + $0x4] sm:$0xf] %vm476, %v469
  %479 = vst.msk [vmem:[%s3 + $0x8] sm:$0xf] %vm476, %v470
  %480 = vst.msk [vmem:[%s3 + $0xc] sm:$0xf] %vm476, %v471
  // Predicated region
  $region14: #{generator_forward.15} parent=0 // pred_check
    _
  $region15: #{generator_forward.15} parent=0 // pred_check_branch
    %482 = sbr.rel (0) target = $region17
  $region16: #{generator_forward.15} parent=0 // pred_region
    _
  $region17: #{generator_forward.15} parent=0 // pred_fallthru
    _
  // Predicated region
  $region18: #{generator_forward.15} parent=0 // pred_check
    _
  $region19: #{generator_forward.15} parent=0 // pred_check_branch
    %484 = sbr.rel (0) target = $region21
  $region20: #{generator_forward.15} parent=0 // pred_region
    _
  $region21: #{generator_forward.15} parent=0 // pred_fallthru
    _
  // Predicated region
  $region22: #{generator_forward.15} parent=0 // pred_check
    _
  $region23: #{generator_forward.15} parent=0 // pred_check_branch
    %486 = sbr.rel (0) target = $region25
  $region24: #{generator_forward.15} parent=0 // pred_region
    _
  $region25: #{generator_forward.15} parent=0 // pred_fallthru
    _
  // Predicated region
  $region26: #{generator_forward.15} parent=0 // pred_check
    _
  $region27: #{generator_forward.15} parent=0 // pred_check_branch
    %488 = sbr.rel (0) target = $region29
  $region28: #{generator_forward.15} parent=0 // pred_region
    _
  $region29: #{generator_forward.15} parent=0 // pred_fallthru
    _
  // Predicated region
  $region30: #{generator_forward.15} parent=0 // pred_check
    _
  $region31: #{generator_forward.15} parent=0 // pred_check_branch
    %490 = sbr.rel (0) target = $region33
  $region32: #{generator_forward.15} parent=0 // pred_region
    _
  $region33: #{generator_forward.15} parent=0 // pred_fallthru
    _
  // Predicated region
  $region34: #{generator_forward.15} parent=0 // pred_check
    _
  $region35: #{generator_forward.15} parent=0 // pred_check_branch
    %492 = sbr.rel (0) target = $region37
  $region36: #{generator_forward.15} parent=0 // pred_region
    _
  $region37: #{generator_forward.15} parent=0 // pred_fallthru
    _

// kernel: generator_forward.19
$region0: #{generator_forward.19}
  #allocation0 [shape = 'u32[]', space=smem, size = 0x4, offset = 0x4, fixed_abs, tag = 'smem constant byte address 0x4 - core index']
  #allocation1 [shape = 'u32[144,128]{1,0:T(1,128)}', space=vmem, size = 0x12000, scoped, tag = 'internal scratch']
  %s0 = inlined_call_operand.vmem [shape: bf16[128,64], index: 0, kind: input, shape index: {}]
  %s1 = inlined_call_operand.vmem [shape: f32[1,64], index: 1, kind: input, shape index: {}]
  %s2 = inlined_call_operand.vmem [shape: f32[1,64], index: 2, kind: input, shape index: {}]
  %s3 = inlined_call_operand.vmem [shape: bf16[128,64], index: 3, kind: output, shape index: {}]
  %s4 = sld [smem:[#allocation0]]
  $region22: #{generator_forward.19} parent=0
    _
  %s6 = ssub.s32 1, %s4
  %s7 = scalar_select 0, %s6, %s4
  // Predicated region
  $region2: #{generator_forward.19} parent=0 // pred_check
    _
  $region3: #{generator_forward.19} parent=0 // pred_check_branch
    %9 = sbr.rel (0) target = $region5
  $region4: #{generator_forward.19} parent=0 // pred_region
    _
  $region5: #{generator_forward.19} parent=0 // pred_fallthru
    _
  // Predicated region
  $region6: #{generator_forward.19} parent=0 // pred_check
    _
  $region7: #{generator_forward.19} parent=0 // pred_check_branch
    %11 = sbr.rel (0) target = $region9
  $region8: #{generator_forward.19} parent=0 // pred_region
    _
  $region9: #{generator_forward.19} parent=0 // pred_fallthru
    _
  // Predicated region
  $region10: #{generator_forward.19} parent=0 // pred_check
    _
  $region11: #{generator_forward.19} parent=0 // pred_check_branch
    %13 = sbr.rel (0) target = $region13
  $region12: #{generator_forward.19} parent=0 // pred_region
    _
  $region13: #{generator_forward.19} parent=0 // pred_fallthru
    _
  %v14 = vld [vmem:[%s0] sm:$0xf]
  %v15 = vld [vmem:[%s0 + $0x4] sm:$0xf]
  %v16 = vld [vmem:[%s0 + $0x8] sm:$0xf]
  %v17 = vld [vmem:[%s0 + $0xc] sm:$0xf]
  %v18 = vld [vmem:[%s0 + $0x10] sm:$0xf]
  %v19 = vld [vmem:[%s0 + $0x14] sm:$0xf]
  %v20 = vld [vmem:[%s0 + $0x18] sm:$0xf]
  %v21 = vld [vmem:[%s0 + $0x1c] sm:$0xf]
  %v22 = vld [vmem:[%s0 + $0x20] sm:$0xf]
  %v23 = vld [vmem:[%s0 + $0x24] sm:$0xf]
  %v24 = vld [vmem:[%s0 + $0x28] sm:$0xf]
  %v25 = vld [vmem:[%s0 + $0x2c] sm:$0xf]
  %v26 = vld [vmem:[%s0 + $0x30] sm:$0xf]
  %v27 = vld [vmem:[%s0 + $0x34] sm:$0xf]
  %v28 = vld [vmem:[%s0 + $0x38] sm:$0xf]
  %v29 = vld [vmem:[%s0 + $0x3c] sm:$0xf]
  %v30 = vunpack.c.l.bf16 %v14
  %v31 = vunpack.c.l.bf16 %v15
  %v32 = vunpack.c.l.bf16 %v16
  %v33 = vunpack.c.l.bf16 %v17
  %v34 = vunpack.c.l.bf16 %v18
  %v35 = vunpack.c.l.bf16 %v19
  %v36 = vunpack.c.l.bf16 %v20
  %v37 = vunpack.c.l.bf16 %v21
  %v38 = vunpack.c.l.bf16 %v22
  %v39 = vunpack.c.l.bf16 %v23
  %v40 = vunpack.c.l.bf16 %v24
  %v41 = vunpack.c.l.bf16 %v25
  %v42 = vunpack.c.l.bf16 %v26
  %v43 = vunpack.c.l.bf16 %v27
  %v44 = vunpack.c.l.bf16 %v28
  %v45 = vunpack.c.l.bf16 %v29
  %v46 = vld [vmem:[%s1] sm:$0x1]
  %v48 = vlaneseq
  %v49 = vshrl.u32 %v48, 7
  %v50 = vsub.s32 0, %v49
  %v51 = vrot.slane %v46, %v50
  %v53 = vmul.f32 %v30, %v51
  %v54 = vmul.f32 %v31, %v51
  %v55 = vmul.f32 %v32, %v51
  %v56 = vmul.f32 %v33, %v51
  %v57 = vmul.f32 %v34, %v51
  %v58 = vmul.f32 %v35, %v51
  %v59 = vmul.f32 %v36, %v51
  %v60 = vmul.f32 %v37, %v51
  %v61 = vmul.f32 %v38, %v51
  %v62 = vmul.f32 %v39, %v51
  %v63 = vmul.f32 %v40, %v51
  %v64 = vmul.f32 %v41, %v51
  %v65 = vmul.f32 %v42, %v51
  %v66 = vmul.f32 %v43, %v51
  %v67 = vmul.f32 %v44, %v51
  %v68 = vmul.f32 %v45, %v51
  %v69 = vld [vmem:[%s2] sm:$0x1]
  %v71 = vlaneseq
  %v72 = vshrl.u32 %v71, 7
  %v73 = vsub.s32 0, %v72
  %v74 = vrot.slane %v69, %v73
  %v76 = vadd.f32 %v53, %v74
  %v77 = vadd.f32 %v54, %v74
  %v78 = vadd.f32 %v55, %v74
  %v79 = vadd.f32 %v56, %v74
  %v80 = vadd.f32 %v57, %v74
  %v81 = vadd.f32 %v58, %v74
  %v82 = vadd.f32 %v59, %v74
  %v83 = vadd.f32 %v60, %v74
  %v84 = vadd.f32 %v61, %v74
  %v85 = vadd.f32 %v62, %v74
  %v86 = vadd.f32 %v63, %v74
  %v87 = vadd.f32 %v64, %v74
  %v88 = vadd.f32 %v65, %v74
  %v89 = vadd.f32 %v66, %v74
  %v90 = vadd.f32 %v67, %v74
  %v91 = vadd.f32 %v68, %v74
  %v92 = vmax.f32 %v76, 0.0
  %v93 = vmax.f32 %v77, 0.0
  %v94 = vmax.f32 %v78, 0.0
  %v95 = vmax.f32 %v79, 0.0
  %v96 = vmax.f32 %v80, 0.0
  %v97 = vmax.f32 %v81, 0.0
  %v98 = vmax.f32 %v82, 0.0
  %v99 = vmax.f32 %v83, 0.0
  %v100 = vmax.f32 %v84, 0.0
  %v101 = vmax.f32 %v85, 0.0
  %v102 = vmax.f32 %v86, 0.0
  %v103 = vmax.f32 %v87, 0.0
  %v104 = vmax.f32 %v88, 0.0
  %v105 = vmax.f32 %v89, 0.0
  %v106 = vmax.f32 %v90, 0.0
  %v107 = vmax.f32 %v91, 0.0
  %v108 = vpack.c.bf16 %v93, %v92
  %v109 = vpack.c.bf16 %v95, %v94
  %v110 = vpack.c.bf16 %v97, %v96
  %v111 = vpack.c.bf16 %v99, %v98
  %v112 = vpack.c.bf16 %v101, %v100
  %v113 = vpack.c.bf16 %v103, %v102
  %v114 = vpack.c.bf16 %v105, %v104
  %v115 = vpack.c.bf16 %v107, %v106
  %v124 = vunpack.c.l.b16 %v108
  %v125 = vunpack.c.h.b16 %v108
  %v126 = vunpack.c.l.b16 %v109
  %v127 = vunpack.c.h.b16 %v109
  %v128 = vunpack.c.l.b16 %v110
  %v129 = vunpack.c.h.b16 %v110
  %v130 = vunpack.c.l.b16 %v111
  %v131 = vunpack.c.h.b16 %v111
  %v132 = vunpack.c.l.b16 %v112
  %v133 = vunpack.c.h.b16 %v112
  %v134 = vunpack.c.l.b16 %v113
  %v135 = vunpack.c.h.b16 %v113
  %v136 = vunpack.c.l.b16 %v114
  %v137 = vunpack.c.h.b16 %v114
  %v138 = vunpack.c.l.b16 %v115
  %v139 = vunpack.c.h.b16 %v115
  %v140 = vpack.c.b16 %v124, %v124
  %v141 = vpack.c.b16 %v125, %v125
  %v142 = vpack.c.b16 %v126, %v126
  %v143 = vpack.c.b16 %v127, %v127
  %v144 = vpack.c.b16 %v128, %v128
  %v145 = vpack.c.b16 %v129, %v129
  %v146 = vpack.c.b16 %v130, %v130
  %v147 = vpack.c.b16 %v131, %v131
  %v148 = vpack.c.b16 %v132, %v132
  %v149 = vpack.c.b16 %v133, %v133
  %v150 = vpack.c.b16 %v134, %v134
  %v151 = vpack.c.b16 %v135, %v135
  %v152 = vpack.c.b16 %v136, %v136
  %v153 = vpack.c.b16 %v137, %v137
  %v154 = vpack.c.b16 %v138, %v138
  %v155 = vpack.c.b16 %v139, %v139
  %vm172 = vcmask 519168
  %173 = vst.msk [vmem:[%s3] sm:$0xf] %vm172, %v140
  %174 = vst.msk [vmem:[%s3 + $0x4] sm:$0xf] %vm172, %v141
  %175 = vst.msk [vmem:[%s3 + $0x8] sm:$0xf] %vm172, %v142
  %176 = vst.msk [vmem:[%s3 + $0xc] sm:$0xf] %vm172, %v143
  %177 = vst.msk [vmem:[%s3 + $0x10] sm:$0xf] %vm172, %v144
  %178 = vst.msk [vmem:[%s3 + $0x14] sm:$0xf] %vm172, %v145
  %179 = vst.msk [vmem:[%s3 + $0x18] sm:$0xf] %vm172, %v146
  %180 = vst.msk [vmem:[%s3 + $0x1c] sm:$0xf] %vm172, %v147
  %181 = vst.msk [vmem:[%s3 + $0x20] sm:$0xf] %vm172, %v148
  %182 = vst.msk [vmem:[%s3 + $0x24] sm:$0xf] %vm172, %v149
  %183 = vst.msk [vmem:[%s3 + $0x28] sm:$0xf] %vm172, %v150
  %184 = vst.msk [vmem:[%s3 + $0x2c] sm:$0xf] %vm172, %v151
  %185 = vst.msk [vmem:[%s3 + $0x30] sm:$0xf] %vm172, %v152
  %186 = vst.msk [vmem:[%s3 + $0x34] sm:$0xf] %vm172, %v153
  %187 = vst.msk [vmem:[%s3 + $0x38] sm:$0xf] %vm172, %v154
  %188 = vst.msk [vmem:[%s3 + $0x3c] sm:$0xf] %vm172, %v155
  // Predicated region
  $region14: #{generator_forward.19} parent=0 // pred_check
    _
  $region15: #{generator_forward.19} parent=0 // pred_check_branch
    %190 = sbr.rel (0) target = $region17
  $region16: #{generator_forward.19} parent=0 // pred_region
    _
  $region17: #{generator_forward.19} parent=0 // pred_fallthru
    _
  // Predicated region
  $region18: #{generator_forward.19} parent=0 // pred_check
    _
  $region19: #{generator_forward.19} parent=0 // pred_check_branch
    %192 = sbr.rel (0) target = $region21
  $region20: #{generator_forward.19} parent=0 // pred_region
    _
  $region21: #{generator_forward.19} parent=0 // pred_fallthru
    _

// kernel: generator_forward.20
$region0: #{generator_forward.20}
  #allocation0 [shape = 'u32[]', space=smem, size = 0x4, offset = 0x4, fixed_abs, tag = 'smem constant byte address 0x4 - core index']
  #allocation1 [shape = 'u32[144,128]{1,0:T(1,128)}', space=vmem, size = 0x12000, scoped, tag = 'internal scratch']
  %s0 = inlined_call_operand.vmem [shape: bf16[128,256], index: 0, kind: input, shape index: {}]
  %s1 = inlined_call_operand.vmem [shape: bf16[256,128], index: 1, kind: input, shape index: {}]
  %s2 = inlined_call_operand.vmem [shape: f32[1,128], index: 2, kind: input, shape index: {}]
  %s3 = inlined_call_operand.vmem [shape: f32[128,128], index: 3, kind: output, shape index: {}]
  %s4 = sld [smem:[#allocation0]]
  $region22: #{generator_forward.20} parent=0
    _
  %s6 = ssub.s32 1, %s4
  %s7 = scalar_select 0, %s6, %s4
  // Predicated region
  $region2: #{generator_forward.20} parent=0 // pred_check
    _
  $region3: #{generator_forward.20} parent=0 // pred_check_branch
    %9 = sbr.rel (0) target = $region5
  $region4: #{generator_forward.20} parent=0 // pred_region
    _
  $region5: #{generator_forward.20} parent=0 // pred_fallthru
    _
  // Predicated region
  $region6: #{generator_forward.20} parent=0 // pred_check
    _
  $region7: #{generator_forward.20} parent=0 // pred_check_branch
    %11 = sbr.rel (0) target = $region9
  $region8: #{generator_forward.20} parent=0 // pred_region
    _
  $region9: #{generator_forward.20} parent=0 // pred_fallthru
    _
  // Predicated region
  $region10: #{generator_forward.20} parent=0 // pred_check
    _
  $region11: #{generator_forward.20} parent=0 // pred_check_branch
    %13 = sbr.rel (0) target = $region13
  $region12: #{generator_forward.20} parent=0 // pred_region
    _
  $region13: #{generator_forward.20} parent=0 // pred_fallthru
    _
  %v15 = vld [vmem:[%s0] sm:$0xff]
  %v16 = vld [vmem:[%s0 + $0x8] sm:$0xff]
  %v17 = vld [vmem:[%s0 + $0x10] sm:$0xff]
  %v18 = vld [vmem:[%s0 + $0x18] sm:$0xff]
  %v19 = vld [vmem:[%s0 + $0x20] sm:$0xff]
  %v20 = vld [vmem:[%s0 + $0x28] sm:$0xff]
  %v21 = vld [vmem:[%s0 + $0x30] sm:$0xff]
  %v22 = vld [vmem:[%s0 + $0x38] sm:$0xff]
  %v23 = vld [vmem:[%s0 + $0x40] sm:$0xff]
  %v24 = vld [vmem:[%s0 + $0x48] sm:$0xff]
  %v25 = vld [vmem:[%s0 + $0x50] sm:$0xff]
  %v26 = vld [vmem:[%s0 + $0x58] sm:$0xff]
  %v27 = vld [vmem:[%s0 + $0x60] sm:$0xff]
  %v28 = vld [vmem:[%s0 + $0x68] sm:$0xff]
  %v29 = vld [vmem:[%s0 + $0x70] sm:$0xff]
  %v30 = vld [vmem:[%s0 + $0x78] sm:$0xff]
  %v31 = vld [vmem:[%s1] sm:$0xf]
  %v32 = vld [vmem:[%s1 + $0x4] sm:$0xf]
  %v33 = vld [vmem:[%s1 + $0x8] sm:$0xf]
  %v34 = vld [vmem:[%s1 + $0xc] sm:$0xf]
  %v35 = vld [vmem:[%s1 + $0x10] sm:$0xf]
  %v36 = vld [vmem:[%s1 + $0x14] sm:$0xf]
  %v37 = vld [vmem:[%s1 + $0x18] sm:$0xf]
  %v38 = vld [vmem:[%s1 + $0x1c] sm:$0xf]
  %v39 = vld [vmem:[%s1 + $0x20] sm:$0xf]
  %v40 = vld [vmem:[%s1 + $0x24] sm:$0xf]
  %v41 = vld [vmem:[%s1 + $0x28] sm:$0xf]
  %v42 = vld [vmem:[%s1 + $0x2c] sm:$0xf]
  %v43 = vld [vmem:[%s1 + $0x30] sm:$0xf]
  %v44 = vld [vmem:[%s1 + $0x34] sm:$0xf]
  %v45 = vld [vmem:[%s1 + $0x38] sm:$0xf]
  %v46 = vld [vmem:[%s1 + $0x3c] sm:$0xf]
  %v47 = vld [vmem:[%s1 + $0x40] sm:$0xf]
  %v48 = vld [vmem:[%s1 + $0x44] sm:$0xf]
  %v49 = vld [vmem:[%s1 + $0x48] sm:$0xf]
  %v50 = vld [vmem:[%s1 + $0x4c] sm:$0xf]
  %v51 = vld [vmem:[%s1 + $0x50] sm:$0xf]
  %v52 = vld [vmem:[%s1 + $0x54] sm:$0xf]
  %v53 = vld [vmem:[%s1 + $0x58] sm:$0xf]
  %v54 = vld [vmem:[%s1 + $0x5c] sm:$0xf]
  %v55 = vld [vmem:[%s1 + $0x60] sm:$0xf]
  %v56 = vld [vmem:[%s1 + $0x64] sm:$0xf]
  %v57 = vld [vmem:[%s1 + $0x68] sm:$0xf]
  %v58 = vld [vmem:[%s1 + $0x6c] sm:$0xf]
  %v59 = vld [vmem:[%s1 + $0x70] sm:$0xf]
  %v60 = vld [vmem:[%s1 + $0x74] sm:$0xf]
  %v61 = vld [vmem:[%s1 + $0x78] sm:$0xf]
  %v62 = vld [vmem:[%s1 + $0x7c] sm:$0xf]
  %v63 = vld [vmem:[%s2] sm:$0x1]
  %v65 = vlaneseq
  %v66 = vshrl.u32 %v65, 7
  %v67 = vsub.s32 0, %v66
  %v68 = vrot.slane %v63, %v67
  %v86 = vunpack.c.l.b16 %v15
  %v87 = vunpack.c.h.b16 %v15
  %v88 = vunpack.c.l.b16 %v16
  %v89 = vunpack.c.h.b16 %v16
  %v90 = vunpack.c.l.b16 %v17
  %v91 = vunpack.c.h.b16 %v17
  %v92 = vunpack.c.l.b16 %v18
  %v93 = vunpack.c.h.b16 %v18
  %v94 = vunpack.c.l.b16 %v19
  %v95 = vunpack.c.h.b16 %v19
  %v96 = vunpack.c.l.b16 %v20
  %v97 = vunpack.c.h.b16 %v20
  %v98 = vunpack.c.l.b16 %v21
  %v99 = vunpack.c.h.b16 %v21
  %v100 = vunpack.c.l.b16 %v22
  %v101 = vunpack.c.h.b16 %v22
  %v102 = vunpack.c.l.b16 %v23
  %v103 = vunpack.c.h.b16 %v23
  %v104 = vunpack.c.l.b16 %v24
  %v105 = vunpack.c.h.b16 %v24
  %v106 = vunpack.c.l.b16 %v25
  %v107 = vunpack.c.h.b16 %v25
  %v108 = vunpack.c.l.b16 %v26
  %v109 = vunpack.c.h.b16 %v26
  %v110 = vunpack.c.l.b16 %v27
  %v111 = vunpack.c.h.b16 %v27
  %v112 = vunpack.c.l.b16 %v28
  %v113 = vunpack.c.h.b16 %v28
  %v114 = vunpack.c.l.b16 %v29
  %v115 = vunpack.c.h.b16 %v29
  %v116 = vunpack.c.l.b16 %v30
  %v117 = vunpack.c.h.b16 %v30
  %v118 = vpack.c.b16 %v88, %v86
  %v119 = vpack.c.b16 %v89, %v87
  %v120 = vpack.c.b16 %v92, %v90
  %v121 = vpack.c.b16 %v93, %v91
  %v122 = vpack.c.b16 %v96, %v94
  %v123 = vpack.c.b16 %v97, %v95
  %v124 = vpack.c.b16 %v100, %v98
  %v125 = vpack.c.b16 %v101, %v99
  %v126 = vpack.c.b16 %v104, %v102
  %v127 = vpack.c.b16 %v105, %v103
  %v128 = vpack.c.b16 %v108, %v106
  %v129 = vpack.c.b16 %v109, %v107
  %v130 = vpack.c.b16 %v112, %v110
  %v131 = vpack.c.b16 %v113, %v111
  %v132 = vpack.c.b16 %v116, %v114
  %v133 = vpack.c.b16 %v117, %v115
  %v182 = vunpack.c.l.b16 %v31
  %v183 = vunpack.c.l.b16 %v32
  %v184 = vunpack.c.l.b16 %v33
  %v185 = vunpack.c.l.b16 %v34
  %v186 = vunpack.c.l.b16 %v35
  %v187 = vunpack.c.l.b16 %v36
  %v188 = vunpack.c.l.b16 %v37
  %v189 = vunpack.c.l.b16 %v38
  %v190 = vunpack.c.l.b16 %v39
  %v191 = vunpack.c.l.b16 %v40
  %v192 = vunpack.c.l.b16 %v41
  %v193 = vunpack.c.l.b16 %v42
  %v194 = vunpack.c.l.b16 %v43
  %v195 = vunpack.c.l.b16 %v44
  %v196 = vunpack.c.l.b16 %v45
  %v197 = vunpack.c.l.b16 %v46
  %v198 = vunpack.c.l.b16 %v47
  %v199 = vunpack.c.l.b16 %v48
  %v200 = vunpack.c.l.b16 %v49
  %v201 = vunpack.c.l.b16 %v50
  %v202 = vunpack.c.l.b16 %v51
  %v203 = vunpack.c.l.b16 %v52
  %v204 = vunpack.c.l.b16 %v53
  %v205 = vunpack.c.l.b16 %v54
  %v206 = vunpack.c.l.b16 %v55
  %v207 = vunpack.c.l.b16 %v56
  %v208 = vunpack.c.l.b16 %v57
  %v209 = vunpack.c.l.b16 %v58
  %v210 = vunpack.c.l.b16 %v59
  %v211 = vunpack.c.l.b16 %v60
  %v212 = vunpack.c.l.b16 %v61
  %v213 = vunpack.c.l.b16 %v62
  %v214 = vpack.c.b16 %v183, %v182
  %v215 = vpack.c.b16 %v185, %v184
  %v216 = vpack.c.b16 %v187, %v186
  %v217 = vpack.c.b16 %v189, %v188
  %v218 = vpack.c.b16 %v191, %v190
  %v219 = vpack.c.b16 %v193, %v192
  %v220 = vpack.c.b16 %v195, %v194
  %v221 = vpack.c.b16 %v197, %v196
  %v222 = vpack.c.b16 %v199, %v198
  %v223 = vpack.c.b16 %v201, %v200
  %v224 = vpack.c.b16 %v203, %v202
  %v225 = vpack.c.b16 %v205, %v204
  %v226 = vpack.c.b16 %v207, %v206
  %v227 = vpack.c.b16 %v209, %v208
  %v228 = vpack.c.b16 %v211, %v210
  %v229 = vpack.c.b16 %v213, %v212
  %246 = vmatprep.subr.bf16.mxu0 0
  %247 = vmatpush1.bf16.msra.mxu0 %v214
  %248 = vmatprep.subr.bf16.mxu0 0
  %249 = vmatpush1.bf16.msra.mxu0 %v215
  %250 = vmatprep.subr.bf16.mxu0 0
  %251 = vmatpush1.bf16.msra.mxu0 %v216
  %252 = vmatprep.subr.bf16.mxu0 0
  %253 = vmatpush1.bf16.msra.mxu0 %v217
  %254 = vmatprep.subr.bf16.mxu0 0
  %255 = vmatpush1.bf16.msra.mxu0 %v218
  %256 = vmatprep.subr.bf16.mxu0 0
  %257 = vmatpush1.bf16.msra.mxu0 %v219
  %258 = vmatprep.subr.bf16.mxu0 0
  %259 = vmatpush1.bf16.msra.mxu0 %v220
  %260 = vmatprep.subr.bf16.mxu0 0
  %261 = vmatpush1.bf16.msra.mxu0 %v221
  %262 = vmatprep.subr.bf16.mxu0 0
  %263 = vmatpush1.bf16.msra.mxu0 %v222
  %264 = vmatprep.subr.bf16.mxu0 0
  %265 = vmatpush1.bf16.msra.mxu0 %v223
  %266 = vmatprep.subr.bf16.mxu0 0
  %267 = vmatpush1.bf16.msra.mxu0 %v224
  %268 = vmatprep.subr.bf16.mxu0 0
  %269 = vmatpush1.bf16.msra.mxu0 %v225
  %270 = vmatprep.subr.bf16.mxu0 0
  %271 = vmatpush1.bf16.msra.mxu0 %v226
  %272 = vmatprep.subr.bf16.mxu0 0
  %273 = vmatpush1.bf16.msra.mxu0 %v227
  %274 = vmatprep.subr.bf16.mxu0 0
  %275 = vmatpush1.bf16.msra.mxu0 %v228
  %276 = vmatprep.subr.bf16.mxu0 0
  %277 = vmatpush1.bf16.msra.mxu0 %v229
  %278 = vmatprep.mubr.bf16.mxu0 %v119
  %279 = vmatmul.mubr.bf16.gmra.mrb[0].mxu0 %v118
  %v280 = vpop.f32.mrb[0].mxu0
  %v281 = vadd.f32 %v68, %v280
  %v282 = vpop.f32.mrb[0].mxu0
  %v283 = vpop.f32.mrb[0].mxu0
  %v284 = vadd.f32 %v68, %v283
  %v285 = vpop.f32.mrb[0].mxu0
  %286 = vmatprep.mubr.bf16.mxu0 %v121
  %287 = vmatmul.mubr.bf16.gmra.mrb[0].mxu0 %v120
  %v288 = vpop.f32.mrb[0].mxu0
  %v289 = vadd.f32 %v68, %v288
  %v290 = vpop.f32.mrb[0].mxu0
  %v291 = vpop.f32.mrb[0].mxu0
  %v292 = vadd.f32 %v68, %v291
  %v293 = vpop.f32.mrb[0].mxu0
  %294 = vmatprep.mubr.bf16.mxu0 %v123
  %295 = vmatmul.mubr.bf16.gmra.mrb[0].mxu0 %v122
  %v296 = vpop.f32.mrb[0].mxu0
  %v297 = vadd.f32 %v68, %v296
  %v298 = vpop.f32.mrb[0].mxu0
  %v299 = vpop.f32.mrb[0].mxu0
  %v300 = vadd.f32 %v68, %v299
  %v301 = vpop.f32.mrb[0].mxu0
  %302 = vmatprep.mubr.bf16.mxu0 %v125
  %303 = vmatmul.mubr.bf16.gmra.mrb[0].mxu0 %v124
  %v304 = vpop.f32.mrb[0].mxu0
  %v305 = vadd.f32 %v68, %v304
  %v306 = vpop.f32.mrb[0].mxu0
  %v307 = vpop.f32.mrb[0].mxu0
  %v308 = vadd.f32 %v68, %v307
  %v309 = vpop.f32.mrb[0].mxu0
  %310 = vmatprep.mubr.bf16.mxu0 %v127
  %311 = vmatmul.mubr.bf16.gmra.mrb[0].mxu0 %v126
  %v312 = vpop.f32.mrb[0].mxu0
  %v313 = vadd.f32 %v68, %v312
  %v314 = vpop.f32.mrb[0].mxu0
  %v315 = vpop.f32.mrb[0].mxu0
  %v316 = vadd.f32 %v68, %v315
  %v317 = vpop.f32.mrb[0].mxu0
  %318 = vmatprep.mubr.bf16.mxu0 %v129
  %319 = vmatmul.mubr.bf16.gmra.mrb[0].mxu0 %v128
  %v320 = vpop.f32.mrb[0].mxu0
  %v321 = vadd.f32 %v68, %v320
  %v322 = vpop.f32.mrb[0].mxu0
  %v323 = vpop.f32.mrb[0].mxu0
  %v324 = vadd.f32 %v68, %v323
  %v325 = vpop.f32.mrb[0].mxu0
  %326 = vmatprep.mubr.bf16.mxu0 %v131
  %327 = vmatmul.mubr.bf16.gmra.mrb[0].mxu0 %v130
  %v328 = vpop.f32.mrb[0].mxu0
  %v329 = vadd.f32 %v68, %v328
  %v330 = vpop.f32.mrb[0].mxu0
  %v331 = vpop.f32.mrb[0].mxu0
  %v332 = vadd.f32 %v68, %v331
  %v333 = vpop.f32.mrb[0].mxu0
  %334 = vmatprep.mubr.bf16.mxu0 %v133
  %335 = vmatmul.mubr.bf16.gmra.mrb[0].mxu0 %v132
  %v336 = vpop.f32.mrb[0].mxu0
  %v337 = vadd.f32 %v68, %v336
  %v338 = vpop.f32.mrb[0].mxu0
  %v339 = vpop.f32.mrb[0].mxu0
  %v340 = vadd.f32 %v68, %v339
  %v341 = vpop.f32.mrb[0].mxu0
  %342 = vdwg.mxu0
  %v343 = vtanh.pop %v281
  %v344 = vtanh.pop %v284
  %v345 = vtanh.pop %v289
  %v346 = vtanh.pop %v292
  %v347 = vtanh.pop %v297
  %v348 = vtanh.pop %v300
  %v349 = vtanh.pop %v305
  %v350 = vtanh.pop %v308
  %v351 = vtanh.pop %v313
  %v352 = vtanh.pop %v316
  %v353 = vtanh.pop %v321
  %v354 = vtanh.pop %v324
  %v355 = vtanh.pop %v329
  %v356 = vtanh.pop %v332
  %v357 = vtanh.pop %v337
  %v358 = vtanh.pop %v340
  %359 = vst [vmem:[%s3] sm:$0xff] %v343
  %360 = vst [vmem:[%s3 + $0x8] sm:$0xff] %v344
  %361 = vst [vmem:[%s3 + $0x10] sm:$0xff] %v345
  %362 = vst [vmem:[%s3 + $0x18] sm:$0xff] %v346
  %363 = vst [vmem:[%s3 + $0x20] sm:$0xff] %v347
  %364 = vst [vmem:[%s3 + $0x28] sm:$0xff] %v348
  %365 = vst [vmem:[%s3 + $0x30] sm:$0xff] %v349
  %366 = vst [vmem:[%s3 + $0x38] sm:$0xff] %v350
  %367 = vst [vmem:[%s3 + $0x40] sm:$0xff] %v351
  %368 = vst [vmem:[%s3 + $0x48] sm:$0xff] %v352
  %369 = vst [vmem:[%s3 + $0x50] sm:$0xff] %v353
  %370 = vst [vmem:[%s3 + $0x58] sm:$0xff] %v354
  %371 = vst [vmem:[%s3 + $0x60] sm:$0xff] %v355
  %372 = vst [vmem:[%s3 + $0x68] sm:$0xff] %v356
  %373 = vst [vmem:[%s3 + $0x70] sm:$0xff] %v357
  %374 = vst [vmem:[%s3 + $0x78] sm:$0xff] %v358
  // Predicated region
  $region14: #{generator_forward.20} parent=0 // pred_check
    _
  $region15: #{generator_forward.20} parent=0 // pred_check_branch
    %376 = sbr.rel (0) target = $region17
  $region16: #{generator_forward.20} parent=0 // pred_region
    _
  $region17: #{generator_forward.20} parent=0 // pred_fallthru
    _
  // Predicated region
  $region18: #{generator_forward.20} parent=0 // pred_check
    _
  $region19: #{generator_forward.20} parent=0 // pred_check_branch
    %378 = sbr.rel (0) target = $region21
  $region20: #{generator_forward.20} parent=0 // pred_region
    _
  $region21: #{generator_forward.20} parent=0 // pred_fallthru
    _

</llo_original>
